<compile_context>
chip_gen: v7x
topology: tpu7x:2x2x1
jax: 0.10.0
libtpu: 0.0.40
codegen_flags: <defaults>
</compile_context>

<pallas_src>
import functools

import jax
import jax.numpy as jnp
from jax import lax
from jax.experimental import pallas as pl
from jax.experimental.pallas import tpu as pltpu

DT = 0.1
STEP_JITTER = 0.01      # TODO(synk): per-step randn jitter not reproduced (deterministic dt step)
IMAGE_MEAN = 0.5        # mean cancels in (img - mean)/std - (rgb - mean)/std
IMAGE_STD = 0.25
LANES = 128


# ----------------------------------------------------------------------------
# fused ray setup + ray march + compositing + loss partials (one tile of rays)
# ----------------------------------------------------------------------------
def ray_march_kernel(nsteps_ref, sc_ref, pix_ref, u_ref, bg_ref, img_ref,
                     rgb_ref, alpha_ref, len_ref, sqerr_ref, loss_ref,
                     *, dt, image_std, n_rays):
    b = pl.program_id(0)
    tile = pl.program_id(1)
    tile_s = pix_ref.shape[2]

    # ---- scalar parameters from SMEM (cheap scalar loads, hoisted) ----------
    rot = [[sc_ref[b, 3 * i + j] for j in range(3)] for i in range(3)]
    cam = [sc_ref[b, 9 + k] for k in range(3)]
    foc = [sc_ref[b, 12 + k] for k in range(2)]
    pp = [sc_ref[b, 14 + k] for k in range(2)]
    dec = [sc_ref[b, 16 + k] for k in range(16)]
    wgt = sc_ref[b, 32]                      # image_valid * valid_input
    nsteps = nsteps_ref[0]

    # ---- real-ray mask from iota (no HBM mask plane) ------------------------
    sub = lax.broadcasted_iota(jnp.int32, (tile_s, LANES), 0)
    lane = lax.broadcasted_iota(jnp.int32, (tile_s, LANES), 1)
    flat = (tile * tile_s + sub) * LANES + lane
    mask_b = flat < n_rays
    mask_f = mask_b.astype(jnp.float32)

    u = u_ref[0, 0]                          # start-jitter uniforms

    # ---- ray directions (fused ray setup) -----------------------------------
    rc0 = (pix_ref[0, 0] - pp[0]) / foc[0]
    rc1 = (pix_ref[0, 1] - pp[1]) / foc[1]
    # world_dir[j] = sum_i rot[i, j] * cam_dir[i], cam_dir = (rc0, rc1, 1)
    rd = [rot[0][j] * rc0 + rot[1][j] * rc1 + rot[2][j] for j in range(3)]
    inv_n = lax.rsqrt(rd[0] * rd[0] + rd[1] * rd[1] + rd[2] * rd[2])
    rd = [d * inv_n for d in rd]

    # ---- unit-box slab intersection -----------------------------------------
    t_min = None
    t_max = None
    for k in range(3):
        dk = jnp.where(rd[k] == 0.0, 1e-12, rd[k])   # guard 0/0 -> NaN
        a = (-1.0 - cam[k]) / dk
        c = (1.0 - cam[k]) / dk
        lo = jnp.minimum(a, c)
        hi = jnp.maximum(a, c)
        t_min = lo if t_min is None else jnp.maximum(t_min, lo)
        t_max = hi if t_max is None else jnp.minimum(t_max, hi)
    inter = t_min < t_max
    t0 = jnp.maximum(jnp.where(inter, t_min, 0.0), 0.0) - dt * u
    # pos strictly inside the box  <=>  t_lo < t < t_hi (empty interval for
    # non-hitting or padded rays -> mask folded into the bounds, saves one
    # vmul per march step)
    box = inter & mask_b
    t_lo = jnp.where(box, t_min, 1.0)
    t_hi = jnp.where(box, t_max, 0.0)

    # decoded synthetic RGBA field parameters
    wr, wg, wb = dec[0:3], dec[3:6], dec[6:9]
    b_r, b_g, b_b = dec[9], dec[10], dec[11]
    wa = dec[12:15]
    ba = dec[15]

    zeros = jnp.zeros_like(t0)

    def body(i, carry):
        t, cr, cg, cb, alpha, length = carry
        valid = ((t > t_lo) & (t < t_hi)).astype(jnp.float32)
        p0 = cam[0] + rd[0] * t
        p1 = cam[1] + rd[1] * t
        p2 = cam[2] + rd[2] * t
        # TODO(synk): volume_sampler is an injected learned module; a per-batch
        # affine RGBA field (sigmoid rgb / softplus alpha) stands in here.
        sr = jax.nn.sigmoid(wr[0] * p0 + wr[1] * p1 + wr[2] * p2 + b_r)
        sg = jax.nn.sigmoid(wg[0] * p0 + wg[1] * p1 + wg[2] * p2 + b_g)
        sb = jax.nn.sigmoid(wb[0] * p0 + wb[1] * p1 + wb[2] * p2 + b_b)
        sa = jax.nn.softplus(wa[0] * p0 + wa[1] * p1 + wa[2] * p2 + ba)
        contrib = (jnp.minimum(alpha + sa * dt, 1.0) - alpha) * valid
        cr = cr + sr * contrib
        cg = cg + sg * contrib
        cb = cb + sb * contrib
        alpha = alpha + contrib
        length = length + dt * (contrib == 0.0).astype(jnp.float32)
        t = t + dt
        return t, cr, cg, cb, alpha, length

    _, cr, cg, cb, alpha, length = lax.fori_loop(
        0, nsteps, body, (t0, zeros, zeros, zeros, zeros, zeros))

    # ---- background composite (camera_index is None path) -------------------
    one_m_a = 1.0 - alpha
    out_r = cr + one_m_a * jnp.maximum(bg_ref[0, 0].astype(jnp.float32), 0.0)
    out_g = cg + one_m_a * jnp.maximum(bg_ref[0, 1].astype(jnp.float32), 0.0)
    out_b = cb + one_m_a * jnp.maximum(bg_ref[0, 2].astype(jnp.float32), 0.0)

    rgb_ref[0, 0] = out_r
    rgb_ref[0, 1] = out_g
    rgb_ref[0, 2] = out_b
    alpha_ref[0, 0] = alpha
    len_ref[0, 0] = length

    # ---- alpha prior (masked partial sum for this tile) ----------------------
    ap = jnp.sum(mask_f * (jnp.log(0.1 + alpha)
                           + jnp.log(0.1 + 1.0 - alpha) + 2.20727))

    # ---- RGB squared error / MSE partial sum ---------------------------------
    # ((img - mean)/std - (rgb - mean)/std)^2  ==  ((img - rgb)/std)^2
    inv_std = 1.0 / image_std
    mse = 0.0
    for c, out_c in enumerate((out_r, out_g, out_b)):
        im_c = img_ref[0, c].astype(jnp.float32)
        diff = (im_c - out_c) * inv_std
        sq = (wgt * mask_f) * diff * diff
        sqerr_ref[0, c] = sq
        mse = mse + jnp.sum(sq)

    loss_lane = lax.broadcasted_iota(jnp.int32, (1, LANES), 1)
    loss_ref[0, 0] = (jnp.where(loss_lane == 0, ap, 0.0)
                      + jnp.where(loss_lane == 1, mse, 0.0))


# ----------------------------------------------------------------------------
# wrapper (glue in plain JAX)
# ----------------------------------------------------------------------------
def autoencoder_forward(params, encoding, camera_rotation, camera_position,
                        focal, principal_point, pixel_coords, valid_input,
                        image, image_valid, rng_key=None):
    B, H, W, _ = pixel_coords.shape
    R = H * W
    dt = DT
    if rng_key is None:
        rng_key = jax.random.PRNGKey(0)

    # decoder: synthetic per-batch affine RGBA field params.
    # TODO(synk): real decoder is an injected learned module; tiny (B,E)x(E,16)
    # matmul is left to XLA (a Pallas call here is pure launch overhead).
    decoded = jnp.tanh(encoding @ params["w_dec"] + params["b_dec"])     # (B,16)

    wgt = (image_valid * valid_input).astype(jnp.float32).reshape(B, 1)
    scalars = jnp.concatenate([
        camera_rotation.reshape(B, 9).astype(jnp.float32),
        camera_position.reshape(B, 3).astype(jnp.float32),
        focal.reshape(B, 2).astype(jnp.float32),
        principal_point.reshape(B, 2).astype(jnp.float32),
        decoded.reshape(B, 16).astype(jnp.float32),
        wgt,
    ], axis=1)                                                           # (B,33)

    # per-ray start jitter (torch: t = t - dt * rand_like(t))
    u = jax.random.uniform(rng_key, (B, R), dtype=jnp.float32)

    # trip count of the torch `while not done.all()` loop, computed on device
    # (no host sync, no per-geometry recompiles); deterministic step = dt.
    rdw = (pixel_coords - principal_point[:, None, None, :]) / focal[:, None, None, :]
    rdw = jnp.concatenate([rdw, jnp.ones_like(rdw[..., :1])], axis=-1)
    rdw = jnp.sum(camera_rotation[:, None, None, :, :] * rdw[..., :, None], axis=-2)
    rdw = rdw / jnp.sqrt(jnp.sum(rdw ** 2, axis=-1, keepdims=True))
    rdw = jnp.where(rdw == 0.0, 1e-12, rdw)
    t1 = (-1.0 - camera_position[:, None, None, :]) / rdw
    t2 = (1.0 - camera_position[:, None, None, :]) / rdw
    t_min = jnp.max(jnp.minimum(t1, t2), axis=-1)
    t_maxb = jnp.min(jnp.maximum(t1, t2), axis=-1)
    inter = t_min < t_maxb
    t_start = jnp.maximum(jnp.where(inter, t_min, 0.0), 0.0) - dt * u.reshape(B, H, W)
    t_maxb = jnp.where(inter, t_maxb, 0.0)
    nsteps = jnp.maximum(jnp.ceil(jnp.max((t_maxb - t_start) / dt)), 1.0)
    nsteps = jnp.minimum(nsteps, 4096.0).astype(jnp.int32).reshape(1)

    # ---- sublane/lane-dense ray tiling --------------------------------------
    S_raw = (R + LANES - 1) // LANES
    TILE_S = 32 if S_raw >= 32 else ((S_raw + 7) // 8) * 8
    n_tiles = (S_raw + TILE_S - 1) // TILE_S
    S = n_tiles * TILE_S
    R_pad = S * LANES

    def to_tiles(x_flat, dtype=jnp.float32):
        n, c, _ = x_flat.shape
        x = jnp.pad(x_flat, ((0, 0), (0, 0), (0, R_pad - R)))
        return x.reshape(n, c, S, LANES).astype(dtype)

    pix_t = to_tiles(jnp.transpose(pixel_coords, (0, 3, 1, 2)).reshape(B, 2, R))
    u_t = to_tiles(u.reshape(B, 1, R))
    bg_t = to_tiles(params["background"].reshape(1, 3, R), jnp.bfloat16)
    img_t = to_tiles(image.reshape(B, 3, R), jnp.bfloat16)

    def blk(c):
        return pl.BlockSpec((1, c, TILE_S, LANES), lambda b_, t_: (b_, 0, t_, 0))

    smem_spec = pl.BlockSpec(memory_space=pltpu.MemorySpace.SMEM)

    kernel = functools.partial(ray_march_kernel, dt=dt, image_std=IMAGE_STD,
                               n_rays=R)
    outs = pl.pallas_call(
        kernel,
        out_shape=(
            jax.ShapeDtypeStruct((B, 3, S, LANES), jnp.float32),       # rgb
            jax.ShapeDtypeStruct((B, 1, S, LANES), jnp.float32),       # alpha
            jax.ShapeDtypeStruct((B, 1, S, LANES), jnp.float32),       # raw length
            jax.ShapeDtypeStruct((B, 3, S, LANES), jnp.float32),       # sqerr
            jax.ShapeDtypeStruct((B, n_tiles, 1, LANES), jnp.float32)  # loss partials
        ),
        grid=(B, n_tiles),
        in_specs=[
            smem_spec,                                                 # nsteps (1,)
            smem_spec,                                                 # scalars (B,33)
            blk(2),                                                    # pixel coords
            blk(1),                                                    # start jitter
            pl.BlockSpec((1, 3, TILE_S, LANES),
                         lambda b_, t_: (0, 0, t_, 0)),                # background (shared)
            blk(3),                                                    # image (bf16)
        ],
        out_specs=(
            blk(3), blk(1), blk(1), blk(3),
            pl.BlockSpec((1, 1, 1, LANES), lambda b_, t_: (b_, t_, 0, 0)),
        ),
        compiler_params=pltpu.CompilerParams(
            dimension_semantics=("parallel", "parallel"),
            vmem_limit_bytes=32 * 1024 * 1024),
    )(nsteps, scalars, pix_t, u_t, bg_t, img_t)

    rgb_t_o, alpha_t_o, len_t_o, sqerr_t_o, loss_t = outs

    def from_tiles(x, c):
        return x.reshape(B, c, R_pad)[:, :, :R].reshape(B, c, H, W)

    ray_rgb = from_tiles(rgb_t_o, 3)
    ray_alpha = from_tiles(alpha_t_o, 1)
    length_raw = from_tiles(len_t_o, 1)
    i_rgb_sqerr = from_tiles(sqerr_t_o, 3)

    # global (cross-batch) normalization of ray_length — glue in plain JAX
    ray_length = ray_alpha * length_raw / (jnp.max(length_raw) + jnp.min(length_raw))

    alpha_prior = jnp.sum(loss_t[:, :, 0, 0], axis=1) / float(R)
    i_rgb_mse = jnp.sum(loss_t[:, :, 0, 1], axis=1)
    i_rgb_mse_weight = (image_valid * valid_input).reshape(B) * float(3 * R)

    result = {"losses": {}, "metrics": {}}
    result["losses"]["alpha_prior"] = alpha_prior
    result["losses"]["i_rgb_mse"] = (i_rgb_mse, i_rgb_mse_weight)
    result["i_rgb_rec"] = ray_rgb
    result["i_alpha_rec"] = ray_alpha
    result["i_depth_rec"] = ray_length
    result["i_rgb_sqerr"] = i_rgb_sqerr
    # TODO(synk): SSIM / PSNR metrics come from src.utils.metrics (external) — not implemented.
    return result


if __name__ == "__main__":
    B, H, W, E = 2, 16, 16, 8
    key = jax.random.PRNGKey(0)
    k_enc, k_img, k_dec, k_jit = jax.random.split(key, 4)

    params = {
        "w_dec": 0.5 * jax.random.normal(k_dec, (E, 16), dtype=jnp.float32),
        "b_dec": jnp.zeros((1, 16), jnp.float32),
        "background": jnp.ones((3, H, W), jnp.float32),   # nn.Parameter(torch.ones(3,H,W))
    }

    # deterministic camera setup (cameras looking into the [-1,1]^3 volume)
    c, s = jnp.cos(0.1), jnp.sin(0.1)
    rot1 = jnp.array([[c, 0.0, s], [0.0, 1.0, 0.0], [-s, 0.0, c]], jnp.float32)
    camera_rotation = jnp.stack([jnp.eye(3, dtype=jnp.float32), rot1], axis=0)
    camera_position = jnp.array([[0.0, 0.0, -2.5], [0.3, -0.2, -2.8]], jnp.float32)
    focal = jnp.full((B, 2), 20.0, jnp.float32)
    principal_point = jnp.full((B, 2), 7.5, jnp.float32)

    ys, xs = jnp.meshgrid(jnp.arange(H, dtype=jnp.float32),
                          jnp.arange(W, dtype=jnp.float32), indexing="ij")
    pixel_coords = jnp.broadcast_to(jnp.stack([xs, ys], axis=-1), (B, H, W, 2))

    valid_input = jnp.ones((B,), jnp.float32)
    image_valid = jnp.ones((B,), jnp.float32)
    image = jax.random.uniform(k_img, (B, 3, H, W), dtype=jnp.float32)
    encoding = jax.random.normal(k_enc, (B, E), dtype=jnp.float32)

    result = autoencoder_forward(params, encoding, camera_rotation,
                                 camera_position, focal, principal_point,
                                 pixel_coords, valid_input, image, image_valid,
                                 rng_key=k_jit)

    for leaf in jax.tree_util.tree_leaves(result):
        jax.block_until_ready(leaf)
    print("KERNEL_OK")
</pallas_src>

<mosaic_0001>
module attributes {stable_mosaic.version = 11 : i64} {
  func.func @ray_march_kernel(%arg0: i32, %arg1: i32, %arg2: memref<1xi32, #tpu.memory_space<smem>>, %arg3: memref<2x33xf32, #tpu.memory_space<smem>>, %arg4: memref<1x2x8x128xf32, #tpu.memory_space<vmem>>, %arg5: memref<1x1x8x128xf32, #tpu.memory_space<vmem>>, %arg6: memref<1x3x8x128xbf16, #tpu.memory_space<vmem>>, %arg7: memref<1x3x8x128xbf16, #tpu.memory_space<vmem>>, %arg8: memref<1x3x8x128xf32, #tpu.memory_space<vmem>>, %arg9: memref<1x1x8x128xf32, #tpu.memory_space<vmem>>, %arg10: memref<1x1x8x128xf32, #tpu.memory_space<vmem>>, %arg11: memref<1x3x8x128xf32, #tpu.memory_space<vmem>>, %arg12: memref<1x1x1x128xf32, #tpu.memory_space<vmem>>) attributes {dimension_semantics = [#tpu.dimension_semantics<parallel>, #tpu.dimension_semantics<parallel>], iteration_bounds = array<i64: 2, 1>, scalar_prefetch = 0 : i64, scratch_operands = 0 : i64, tpu.core_type = #tpu.core_type<tc>, window_params = [{transform_indices = @transform_0, window_bounds = array<i64: 1>}, {transform_indices = @transform_1, window_bounds = array<i64: 2, 33>}, {transform_indices = @transform_2, window_bounds = array<i64: 1, 2, 8, 128>}, {transform_indices = @transform_3, window_bounds = array<i64: 1, 1, 8, 128>}, {transform_indices = @transform_4, window_bounds = array<i64: 1, 3, 8, 128>}, {transform_indices = @transform_5, window_bounds = array<i64: 1, 3, 8, 128>}, {transform_indices = @transform_6, window_bounds = array<i64: 1, 3, 8, 128>}, {transform_indices = @transform_7, window_bounds = array<i64: 1, 1, 8, 128>}, {transform_indices = @transform_8, window_bounds = array<i64: 1, 1, 8, 128>}, {transform_indices = @transform_9, window_bounds = array<i64: 1, 3, 8, 128>}, {transform_indices = @transform_10, window_bounds = array<i64: 1, 1, 1, 128>}]} {
    %0 = arith.index_cast %arg0 : i32 to index
    %c0 = arith.constant 0 : index
    %1 = memref.load %arg3[%0, %c0] : memref<2x33xf32, #tpu.memory_space<smem>>
    %2 = arith.index_cast %arg0 : i32 to index
    %c1 = arith.constant 1 : index
    %3 = memref.load %arg3[%2, %c1] : memref<2x33xf32, #tpu.memory_space<smem>>
    %4 = arith.index_cast %arg0 : i32 to index
    %c2 = arith.constant 2 : index
    %5 = memref.load %arg3[%4, %c2] : memref<2x33xf32, #tpu.memory_space<smem>>
    %6 = arith.index_cast %arg0 : i32 to index
    %c3 = arith.constant 3 : index
    %7 = memref.load %arg3[%6, %c3] : memref<2x33xf32, #tpu.memory_space<smem>>
    %8 = arith.index_cast %arg0 : i32 to index
    %c4 = arith.constant 4 : index
    %9 = memref.load %arg3[%8, %c4] : memref<2x33xf32, #tpu.memory_space<smem>>
    %10 = arith.index_cast %arg0 : i32 to index
    %c5 = arith.constant 5 : index
    %11 = memref.load %arg3[%10, %c5] : memref<2x33xf32, #tpu.memory_space<smem>>
    %12 = arith.index_cast %arg0 : i32 to index
    %c6 = arith.constant 6 : index
    %13 = memref.load %arg3[%12, %c6] : memref<2x33xf32, #tpu.memory_space<smem>>
    %14 = arith.index_cast %arg0 : i32 to index
    %c7 = arith.constant 7 : index
    %15 = memref.load %arg3[%14, %c7] : memref<2x33xf32, #tpu.memory_space<smem>>
    %16 = arith.index_cast %arg0 : i32 to index
    %c8 = arith.constant 8 : index
    %17 = memref.load %arg3[%16, %c8] : memref<2x33xf32, #tpu.memory_space<smem>>
    %18 = arith.index_cast %arg0 : i32 to index
    %c9 = arith.constant 9 : index
    %19 = memref.load %arg3[%18, %c9] : memref<2x33xf32, #tpu.memory_space<smem>>
    %20 = arith.index_cast %arg0 : i32 to index
    %c10 = arith.constant 10 : index
    %21 = memref.load %arg3[%20, %c10] : memref<2x33xf32, #tpu.memory_space<smem>>
    %22 = arith.index_cast %arg0 : i32 to index
    %c11 = arith.constant 11 : index
    %23 = memref.load %arg3[%22, %c11] : memref<2x33xf32, #tpu.memory_space<smem>>
    %24 = arith.index_cast %arg0 : i32 to index
    %c12 = arith.constant 12 : index
    %25 = memref.load %arg3[%24, %c12] : memref<2x33xf32, #tpu.memory_space<smem>>
    %26 = arith.index_cast %arg0 : i32 to index
    %c13 = arith.constant 13 : index
    %27 = memref.load %arg3[%26, %c13] : memref<2x33xf32, #tpu.memory_space<smem>>
    %28 = arith.index_cast %arg0 : i32 to index
    %c14 = arith.constant 14 : index
    %29 = memref.load %arg3[%28, %c14] : memref<2x33xf32, #tpu.memory_space<smem>>
    %30 = arith.index_cast %arg0 : i32 to index
    %c15 = arith.constant 15 : index
    %31 = memref.load %arg3[%30, %c15] : memref<2x33xf32, #tpu.memory_space<smem>>
    %32 = arith.index_cast %arg0 : i32 to index
    %c16 = arith.constant 16 : index
    %33 = memref.load %arg3[%32, %c16] : memref<2x33xf32, #tpu.memory_space<smem>>
    %34 = arith.index_cast %arg0 : i32 to index
    %c17 = arith.constant 17 : index
    %35 = memref.load %arg3[%34, %c17] : memref<2x33xf32, #tpu.memory_space<smem>>
    %36 = arith.index_cast %arg0 : i32 to index
    %c18 = arith.constant 18 : index
    %37 = memref.load %arg3[%36, %c18] : memref<2x33xf32, #tpu.memory_space<smem>>
    %38 = arith.index_cast %arg0 : i32 to index
    %c19 = arith.constant 19 : index
    %39 = memref.load %arg3[%38, %c19] : memref<2x33xf32, #tpu.memory_space<smem>>
    %40 = arith.index_cast %arg0 : i32 to index
    %c20 = arith.constant 20 : index
    %41 = memref.load %arg3[%40, %c20] : memref<2x33xf32, #tpu.memory_space<smem>>
    %42 = arith.index_cast %arg0 : i32 to index
    %c21 = arith.constant 21 : index
    %43 = memref.load %arg3[%42, %c21] : memref<2x33xf32, #tpu.memory_space<smem>>
    %44 = arith.index_cast %arg0 : i32 to index
    %c22 = arith.constant 22 : index
    %45 = memref.load %arg3[%44, %c22] : memref<2x33xf32, #tpu.memory_space<smem>>
    %46 = arith.index_cast %arg0 : i32 to index
    %c23 = arith.constant 23 : index
    %47 = memref.load %arg3[%46, %c23] : memref<2x33xf32, #tpu.memory_space<smem>>
    %48 = arith.index_cast %arg0 : i32 to index
    %c24 = arith.constant 24 : index
    %49 = memref.load %arg3[%48, %c24] : memref<2x33xf32, #tpu.memory_space<smem>>
    %50 = arith.index_cast %arg0 : i32 to index
    %c25 = arith.constant 25 : index
    %51 = memref.load %arg3[%50, %c25] : memref<2x33xf32, #tpu.memory_space<smem>>
    %52 = arith.index_cast %arg0 : i32 to index
    %c26 = arith.constant 26 : index
    %53 = memref.load %arg3[%52, %c26] : memref<2x33xf32, #tpu.memory_space<smem>>
    %54 = arith.index_cast %arg0 : i32 to index
    %c27 = arith.constant 27 : index
    %55 = memref.load %arg3[%54, %c27] : memref<2x33xf32, #tpu.memory_space<smem>>
    %56 = arith.index_cast %arg0 : i32 to index
    %c28 = arith.constant 28 : index
    %57 = memref.load %arg3[%56, %c28] : memref<2x33xf32, #tpu.memory_space<smem>>
    %58 = arith.index_cast %arg0 : i32 to index
    %c29 = arith.constant 29 : index
    %59 = memref.load %arg3[%58, %c29] : memref<2x33xf32, #tpu.memory_space<smem>>
    %60 = arith.index_cast %arg0 : i32 to index
    %c30 = arith.constant 30 : index
    %61 = memref.load %arg3[%60, %c30] : memref<2x33xf32, #tpu.memory_space<smem>>
    %62 = arith.index_cast %arg0 : i32 to index
    %c31 = arith.constant 31 : index
    %63 = memref.load %arg3[%62, %c31] : memref<2x33xf32, #tpu.memory_space<smem>>
    %64 = arith.index_cast %arg0 : i32 to index
    %c32 = arith.constant 32 : index
    %65 = memref.load %arg3[%64, %c32] : memref<2x33xf32, #tpu.memory_space<smem>>
    %c0_0 = arith.constant 0 : index
    %66 = memref.load %arg2[%c0_0] : memref<1xi32, #tpu.memory_space<smem>>
    %67 = tpu.iota {dimensions = array<i32: 0>} : vector<8x128xi32>
    %68 = tpu.iota {dimensions = array<i32: 1>} : vector<8x128xi32>
    %c8_i32 = arith.constant 8 : i32
    %69 = arith.muli %arg1, %c8_i32 : i32
    %70 = vector.broadcast %69 : i32 to vector<8x128xi32>
    %71 = arith.addi %70, %67 : vector<8x128xi32>
    %c128_i32 = arith.constant 128 : i32
    %72 = vector.broadcast %c128_i32 : i32 to vector<8x128xi32>
    %73 = arith.muli %71, %72 : vector<8x128xi32>
    %74 = arith.addi %73, %68 : vector<8x128xi32>
    %c256_i32 = arith.constant 256 : i32
    %75 = vector.broadcast %c256_i32 : i32 to vector<8x128xi32>
    %76 = arith.cmpi slt, %74, %75 : vector<8x128xi32>
    %77 = arith.extui %76 : vector<8x128xi1> to vector<8x128xi32>
    %78 = arith.sitofp %77 : vector<8x128xi32> to vector<8x128xf32>
    %c0_1 = arith.constant 0 : index
    %c0_2 = arith.constant 0 : index
    %c0_3 = arith.constant 0 : index
    %c0_4 = arith.constant 0 : index
    %79 = vector.load %arg5[%c0_1, %c0_2, %c0_3, %c0_4] : memref<1x1x8x128xf32, #tpu.memory_space<vmem>>, vector<1x1x8x128xf32>
    %80 = vector.shape_cast %79 : vector<1x1x8x128xf32> to vector<8x128xf32>
    %c0_5 = arith.constant 0 : index
    %c0_6 = arith.constant 0 : index
    %c0_7 = arith.constant 0 : index
    %c0_8 = arith.constant 0 : index
    %81 = vector.load %arg4[%c0_5, %c0_6, %c0_7, %c0_8] : memref<1x2x8x128xf32, #tpu.memory_space<vmem>>, vector<1x1x8x128xf32>
    %82 = vector.shape_cast %81 : vector<1x1x8x128xf32> to vector<8x128xf32>
    %83 = vector.broadcast %29 : f32 to vector<8x128xf32>
    %84 = arith.subf %82, %83 : vector<8x128xf32>
    %85 = vector.broadcast %25 : f32 to vector<8x128xf32>
    %86 = arith.divf %84, %85 : vector<8x128xf32>
    %c0_9 = arith.constant 0 : index
    %c1_10 = arith.constant 1 : index
    %c0_11 = arith.constant 0 : index
    %c0_12 = arith.constant 0 : index
    %87 = vector.load %arg4[%c0_9, %c1_10, %c0_11, %c0_12] : memref<1x2x8x128xf32, #tpu.memory_space<vmem>>, vector<1x1x8x128xf32>
    %88 = vector.shape_cast %87 : vector<1x1x8x128xf32> to vector<8x128xf32>
    %89 = vector.broadcast %31 : f32 to vector<8x128xf32>
    %90 = arith.subf %88, %89 : vector<8x128xf32>
    %91 = vector.broadcast %27 : f32 to vector<8x128xf32>
    %92 = arith.divf %90, %91 : vector<8x128xf32>
    %93 = vector.broadcast %1 : f32 to vector<8x128xf32>
    %94 = arith.mulf %93, %86 : vector<8x128xf32>
    %95 = vector.broadcast %7 : f32 to vector<8x128xf32>
    %96 = arith.mulf %95, %92 : vector<8x128xf32>
    %97 = arith.addf %94, %96 : vector<8x128xf32>
    %98 = vector.broadcast %13 : f32 to vector<8x128xf32>
    %99 = arith.addf %97, %98 : vector<8x128xf32>
    %100 = vector.broadcast %3 : f32 to vector<8x128xf32>
    %101 = arith.mulf %100, %86 : vector<8x128xf32>
    %102 = vector.broadcast %9 : f32 to vector<8x128xf32>
    %103 = arith.mulf %102, %92 : vector<8x128xf32>
    %104 = arith.addf %101, %103 : vector<8x128xf32>
    %105 = vector.broadcast %15 : f32 to vector<8x128xf32>
    %106 = arith.addf %104, %105 : vector<8x128xf32>
    %107 = vector.broadcast %5 : f32 to vector<8x128xf32>
    %108 = arith.mulf %107, %86 : vector<8x128xf32>
    %109 = vector.broadcast %11 : f32 to vector<8x128xf32>
    %110 = arith.mulf %109, %92 : vector<8x128xf32>
    %111 = arith.addf %108, %110 : vector<8x128xf32>
    %112 = vector.broadcast %17 : f32 to vector<8x128xf32>
    %113 = arith.addf %111, %112 : vector<8x128xf32>
    %114 = arith.mulf %99, %99 : vector<8x128xf32>
    %115 = arith.mulf %106, %106 : vector<8x128xf32>
    %116 = arith.addf %114, %115 : vector<8x128xf32>
    %117 = arith.mulf %113, %113 : vector<8x128xf32>
    %118 = arith.addf %116, %117 : vector<8x128xf32>
    %119 = math.rsqrt %118 : vector<8x128xf32>
    %120 = arith.mulf %99, %119 : vector<8x128xf32>
    %121 = arith.mulf %106, %119 : vector<8x128xf32>
    %122 = arith.mulf %113, %119 : vector<8x128xf32>
    %cst = arith.constant 0.000000e+00 : f32
    %123 = vector.broadcast %cst : f32 to vector<8x128xf32>
    %124 = arith.cmpf oeq, %120, %123 : vector<8x128xf32>
    %cst_13 = arith.constant 9.99999996E-13 : f32
    %125 = vector.broadcast %cst_13 : f32 to vector<8x128xf32>
    %126 = arith.select %124, %125, %120 : vector<8x128xi1>, vector<8x128xf32>
    %cst_14 = arith.constant -1.000000e+00 : f32
    %127 = arith.subf %cst_14, %19 : f32
    %128 = vector.broadcast %127 : f32 to vector<8x128xf32>
    %129 = arith.divf %128, %126 : vector<8x128xf32>
    %cst_15 = arith.constant 1.000000e+00 : f32
    %130 = arith.subf %cst_15, %19 : f32
    %131 = vector.broadcast %130 : f32 to vector<8x128xf32>
    %132 = arith.divf %131, %126 : vector<8x128xf32>
    %133 = arith.minimumf %129, %132 : vector<8x128xf32>
    %134 = arith.maximumf %129, %132 : vector<8x128xf32>
    %cst_16 = arith.constant 0.000000e+00 : f32
    %135 = vector.broadcast %cst_16 : f32 to vector<8x128xf32>
    %136 = arith.cmpf oeq, %121, %135 : vector<8x128xf32>
    %cst_17 = arith.constant 9.99999996E-13 : f32
    %137 = vector.broadcast %cst_17 : f32 to vector<8x128xf32>
    %138 = arith.select %136, %137, %121 : vector<8x128xi1>, vector<8x128xf32>
    %cst_18 = arith.constant -1.000000e+00 : f32
    %139 = arith.subf %cst_18, %21 : f32
    %140 = vector.broadcast %139 : f32 to vector<8x128xf32>
    %141 = arith.divf %140, %138 : vector<8x128xf32>
    %cst_19 = arith.constant 1.000000e+00 : f32
    %142 = arith.subf %cst_19, %21 : f32
    %143 = vector.broadcast %142 : f32 to vector<8x128xf32>
    %144 = arith.divf %143, %138 : vector<8x128xf32>
    %145 = arith.minimumf %141, %144 : vector<8x128xf32>
    %146 = arith.maximumf %141, %144 : vector<8x128xf32>
    %147 = arith.maximumf %133, %145 : vector<8x128xf32>
    %148 = arith.minimumf %134, %146 : vector<8x128xf32>
    %cst_20 = arith.constant 0.000000e+00 : f32
    %149 = vector.broadcast %cst_20 : f32 to vector<8x128xf32>
    %150 = arith.cmpf oeq, %122, %149 : vector<8x128xf32>
    %cst_21 = arith.constant 9.99999996E-13 : f32
    %151 = vector.broadcast %cst_21 : f32 to vector<8x128xf32>
    %152 = arith.select %150, %151, %122 : vector<8x128xi1>, vector<8x128xf32>
    %cst_22 = arith.constant -1.000000e+00 : f32
    %153 = arith.subf %cst_22, %23 : f32
    %154 = vector.broadcast %153 : f32 to vector<8x128xf32>
    %155 = arith.divf %154, %152 : vector<8x128xf32>
    %cst_23 = arith.constant 1.000000e+00 : f32
    %156 = arith.subf %cst_23, %23 : f32
    %157 = vector.broadcast %156 : f32 to vector<8x128xf32>
    %158 = arith.divf %157, %152 : vector<8x128xf32>
    %159 = arith.minimumf %155, %158 : vector<8x128xf32>
    %160 = arith.maximumf %155, %158 : vector<8x128xf32>
    %161 = arith.maximumf %147, %159 : vector<8x128xf32>
    %162 = arith.minimumf %148, %160 : vector<8x128xf32>
    %163 = arith.cmpf olt, %161, %162 : vector<8x128xf32>
    %cst_24 = arith.constant 0.000000e+00 : f32
    %164 = vector.broadcast %cst_24 : f32 to vector<8x128xf32>
    %165 = arith.select %163, %161, %164 : vector<8x128xi1>, vector<8x128xf32>
    %cst_25 = arith.constant 0.000000e+00 : f32
    %166 = vector.broadcast %cst_25 : f32 to vector<8x128xf32>
    %167 = arith.maximumf %165, %166 : vector<8x128xf32>
    %cst_26 = arith.constant 1.000000e-01 : f32
    %168 = vector.broadcast %cst_26 : f32 to vector<8x128xf32>
    %169 = arith.mulf %168, %80 : vector<8x128xf32>
    %170 = arith.subf %167, %169 : vector<8x128xf32>
    %171 = arith.andi %163, %76 : vector<8x128xi1>
    %cst_27 = arith.constant 1.000000e+00 : f32
    %172 = vector.broadcast %cst_27 : f32 to vector<8x128xf32>
    %173 = arith.select %171, %161, %172 : vector<8x128xi1>, vector<8x128xf32>
    %cst_28 = arith.constant 0.000000e+00 : f32
    %174 = vector.broadcast %cst_28 : f32 to vector<8x128xf32>
    %175 = arith.select %171, %162, %174 : vector<8x128xi1>, vector<8x128xf32>
    %cst_29 = arith.constant 0.000000e+00 : f32
    %176 = vector.broadcast %cst_29 : f32 to vector<8x128xf32>
    %c0_i32 = arith.constant 0 : i32
    %177 = arith.subi %66, %c0_i32 : i32
    %178 = arith.addi %c0_i32, %177 : i32
    %c1_i32 = arith.constant 1 : i32
    %179:6 = scf.for %arg13 = %c0_i32 to %178 step %c1_i32 iter_args(%arg14 = %170, %arg15 = %176, %arg16 = %176, %arg17 = %176, %arg18 = %176, %arg19 = %176) -> (vector<8x128xf32>, vector<8x128xf32>, vector<8x128xf32>, vector<8x128xf32>, vector<8x128xf32>, vector<8x128xf32>)  : i32 {
      %301 = arith.cmpf ogt, %arg14, %173 : vector<8x128xf32>
      %302 = arith.cmpf olt, %arg14, %175 : vector<8x128xf32>
      %303 = arith.andi %301, %302 : vector<8x128xi1>
      %304 = arith.extui %303 : vector<8x128xi1> to vector<8x128xi32>
      %305 = arith.sitofp %304 : vector<8x128xi32> to vector<8x128xf32>
      %306 = arith.mulf %120, %arg14 : vector<8x128xf32>
      %307 = vector.broadcast %19 : f32 to vector<8x128xf32>
      %308 = arith.addf %307, %306 : vector<8x128xf32>
      %309 = arith.mulf %121, %arg14 : vector<8x128xf32>
      %310 = vector.broadcast %21 : f32 to vector<8x128xf32>
      %311 = arith.addf %310, %309 : vector<8x128xf32>
      %312 = arith.mulf %122, %arg14 : vector<8x128xf32>
      %313 = vector.broadcast %23 : f32 to vector<8x128xf32>
      %314 = arith.addf %313, %312 : vector<8x128xf32>
      %315 = vector.broadcast %33 : f32 to vector<8x128xf32>
      %316 = arith.mulf %315, %308 : vector<8x128xf32>
      %317 = vector.broadcast %35 : f32 to vector<8x128xf32>
      %318 = arith.mulf %317, %311 : vector<8x128xf32>
      %319 = arith.addf %316, %318 : vector<8x128xf32>
      %320 = vector.broadcast %37 : f32 to vector<8x128xf32>
      %321 = arith.mulf %320, %314 : vector<8x128xf32>
      %322 = arith.addf %319, %321 : vector<8x128xf32>
      %323 = vector.broadcast %51 : f32 to vector<8x128xf32>
      %324 = arith.addf %322, %323 : vector<8x128xf32>
      %325 = arith.negf %324 : vector<8x128xf32>
      %326 = math.exp %325 : vector<8x128xf32>
      %cst_109 = arith.constant 1.000000e+00 : f32
      %327 = vector.broadcast %cst_109 : f32 to vector<8x128xf32>
      %328 = arith.addf %327, %326 : vector<8x128xf32>
      %329 = arith.divf %327, %328 : vector<8x128xf32>
      %330 = vector.broadcast %39 : f32 to vector<8x128xf32>
      %331 = arith.mulf %330, %308 : vector<8x128xf32>
      %332 = vector.broadcast %41 : f32 to vector<8x128xf32>
      %333 = arith.mulf %332, %311 : vector<8x128xf32>
      %334 = arith.addf %331, %333 : vector<8x128xf32>
      %335 = vector.broadcast %43 : f32 to vector<8x128xf32>
      %336 = arith.mulf %335, %314 : vector<8x128xf32>
      %337 = arith.addf %334, %336 : vector<8x128xf32>
      %338 = vector.broadcast %53 : f32 to vector<8x128xf32>
      %339 = arith.addf %337, %338 : vector<8x128xf32>
      %340 = arith.negf %339 : vector<8x128xf32>
      %341 = math.exp %340 : vector<8x128xf32>
      %cst_110 = arith.constant 1.000000e+00 : f32
      %342 = vector.broadcast %cst_110 : f32 to vector<8x128xf32>
      %343 = arith.addf %342, %341 : vector<8x128xf32>
      %344 = arith.divf %342, %343 : vector<8x128xf32>
      %345 = vector.broadcast %45 : f32 to vector<8x128xf32>
      %346 = arith.mulf %345, %308 : vector<8x128xf32>
      %347 = vector.broadcast %47 : f32 to vector<8x128xf32>
      %348 = arith.mulf %347, %311 : vector<8x128xf32>
      %349 = arith.addf %346, %348 : vector<8x128xf32>
      %350 = vector.broadcast %49 : f32 to vector<8x128xf32>
      %351 = arith.mulf %350, %314 : vector<8x128xf32>
      %352 = arith.addf %349, %351 : vector<8x128xf32>
      %353 = vector.broadcast %55 : f32 to vector<8x128xf32>
      %354 = arith.addf %352, %353 : vector<8x128xf32>
      %355 = arith.negf %354 : vector<8x128xf32>
      %356 = math.exp %355 : vector<8x128xf32>
      %cst_111 = arith.constant 1.000000e+00 : f32
      %357 = vector.broadcast %cst_111 : f32 to vector<8x128xf32>
      %358 = arith.addf %357, %356 : vector<8x128xf32>
      %359 = arith.divf %357, %358 : vector<8x128xf32>
      %360 = vector.broadcast %57 : f32 to vector<8x128xf32>
      %361 = arith.mulf %360, %308 : vector<8x128xf32>
      %362 = vector.broadcast %59 : f32 to vector<8x128xf32>
      %363 = arith.mulf %362, %311 : vector<8x128xf32>
      %364 = arith.addf %361, %363 : vector<8x128xf32>
      %365 = vector.broadcast %61 : f32 to vector<8x128xf32>
      %366 = arith.mulf %365, %314 : vector<8x128xf32>
      %367 = arith.addf %364, %366 : vector<8x128xf32>
      %368 = vector.broadcast %63 : f32 to vector<8x128xf32>
      %369 = arith.addf %367, %368 : vector<8x128xf32>
      %cst_112 = arith.constant 0.000000e+00 : f32
      %370 = vector.broadcast %cst_112 : f32 to vector<8x128xf32>
      %371 = arith.maximumf %369, %370 : vector<8x128xf32>
      %372 = vector.broadcast %cst_112 : f32 to vector<8x128xf32>
      %373 = arith.subf %369, %372 : vector<8x128xf32>
      %374 = arith.cmpf one, %373, %373 : vector<8x128xf32>
      %375 = vector.broadcast %cst_112 : f32 to vector<8x128xf32>
      %376 = arith.addf %369, %375 : vector<8x128xf32>
      %377 = math.absf %373 : vector<8x128xf32>
      %cst_113 = arith.constant 0.000000e+00 : f32
      %378 = vector.broadcast %cst_113 : f32 to vector<8x128xf32>
      %379 = arith.subf %378, %377 : vector<8x128xf32>
      %380 = math.exp %379 : vector<8x128xf32>
      %381 = math.log1p %380 : vector<8x128xf32>
      %382 = arith.addf %371, %381 : vector<8x128xf32>
      %383 = arith.select %374, %376, %382 : vector<8x128xi1>, vector<8x128xf32>
      %cst_114 = arith.constant 1.000000e-01 : f32
      %384 = vector.broadcast %cst_114 : f32 to vector<8x128xf32>
      %385 = arith.mulf %383, %384 : vector<8x128xf32>
      %386 = arith.addf %arg18, %385 : vector<8x128xf32>
      %cst_115 = arith.constant 1.000000e+00 : f32
      %387 = vector.broadcast %cst_115 : f32 to vector<8x128xf32>
      %388 = arith.minimumf %386, %387 : vector<8x128xf32>
      %389 = arith.subf %388, %arg18 : vector<8x128xf32>
      %390 = arith.mulf %389, %305 : vector<8x128xf32>
      %391 = arith.mulf %329, %390 : vector<8x128xf32>
      %392 = arith.addf %arg15, %391 : vector<8x128xf32>
      %393 = arith.mulf %344, %390 : vector<8x128xf32>
      %394 = arith.addf %arg16, %393 : vector<8x128xf32>
      %395 = arith.mulf %359, %390 : vector<8x128xf32>
      %396 = arith.addf %arg17, %395 : vector<8x128xf32>
      %397 = arith.addf %arg18, %390 : vector<8x128xf32>
      %cst_116 = arith.constant 0.000000e+00 : f32
      %398 = vector.broadcast %cst_116 : f32 to vector<8x128xf32>
      %399 = arith.cmpf oeq, %390, %398 : vector<8x128xf32>
      %400 = arith.extui %399 : vector<8x128xi1> to vector<8x128xi32>
      %401 = arith.sitofp %400 : vector<8x128xi32> to vector<8x128xf32>
      %cst_117 = arith.constant 1.000000e-01 : f32
      %402 = vector.broadcast %cst_117 : f32 to vector<8x128xf32>
      %403 = arith.mulf %402, %401 : vector<8x128xf32>
      %404 = arith.addf %arg19, %403 : vector<8x128xf32>
      %cst_118 = arith.constant 1.000000e-01 : f32
      %405 = vector.broadcast %cst_118 : f32 to vector<8x128xf32>
      %406 = arith.addf %arg14, %405 : vector<8x128xf32>
      scf.yield %406, %392, %394, %396, %397, %404 : vector<8x128xf32>, vector<8x128xf32>, vector<8x128xf32>, vector<8x128xf32>, vector<8x128xf32>, vector<8x128xf32>
    }
    %cst_30 = arith.constant 1.000000e+00 : f32
    %180 = vector.broadcast %cst_30 : f32 to vector<8x128xf32>
    %181 = arith.subf %180, %179#4 : vector<8x128xf32>
    %c0_31 = arith.constant 0 : index
    %c0_32 = arith.constant 0 : index
    %c0_33 = arith.constant 0 : index
    %c0_34 = arith.constant 0 : index
    %182 = vector.load %arg6[%c0_31, %c0_32, %c0_33, %c0_34] : memref<1x3x8x128xbf16, #tpu.memory_space<vmem>>, vector<1x1x8x128xbf16>
    %183 = vector.shape_cast %182 : vector<1x1x8x128xbf16> to vector<8x128xbf16>
    %184 = arith.extf %183 : vector<8x128xbf16> to vector<8x128xf32>
    %cst_35 = arith.constant 0.000000e+00 : f32
    %185 = vector.broadcast %cst_35 : f32 to vector<8x128xf32>
    %186 = arith.maximumf %184, %185 : vector<8x128xf32>
    %187 = arith.mulf %181, %186 : vector<8x128xf32>
    %188 = arith.addf %179#1, %187 : vector<8x128xf32>
    %c0_36 = arith.constant 0 : index
    %c1_37 = arith.constant 1 : index
    %c0_38 = arith.constant 0 : index
    %c0_39 = arith.constant 0 : index
    %189 = vector.load %arg6[%c0_36, %c1_37, %c0_38, %c0_39] : memref<1x3x8x128xbf16, #tpu.memory_space<vmem>>, vector<1x1x8x128xbf16>
    %190 = vector.shape_cast %189 : vector<1x1x8x128xbf16> to vector<8x128xbf16>
    %191 = arith.extf %190 : vector<8x128xbf16> to vector<8x128xf32>
    %cst_40 = arith.constant 0.000000e+00 : f32
    %192 = vector.broadcast %cst_40 : f32 to vector<8x128xf32>
    %193 = arith.maximumf %191, %192 : vector<8x128xf32>
    %194 = arith.mulf %181, %193 : vector<8x128xf32>
    %195 = arith.addf %179#2, %194 : vector<8x128xf32>
    %c0_41 = arith.constant 0 : index
    %c2_42 = arith.constant 2 : index
    %c0_43 = arith.constant 0 : index
    %c0_44 = arith.constant 0 : index
    %196 = vector.load %arg6[%c0_41, %c2_42, %c0_43, %c0_44] : memref<1x3x8x128xbf16, #tpu.memory_space<vmem>>, vector<1x1x8x128xbf16>
    %197 = vector.shape_cast %196 : vector<1x1x8x128xbf16> to vector<8x128xbf16>
    %198 = arith.extf %197 : vector<8x128xbf16> to vector<8x128xf32>
    %cst_45 = arith.constant 0.000000e+00 : f32
    %199 = vector.broadcast %cst_45 : f32 to vector<8x128xf32>
    %200 = arith.maximumf %198, %199 : vector<8x128xf32>
    %201 = arith.mulf %181, %200 : vector<8x128xf32>
    %202 = arith.addf %179#3, %201 : vector<8x128xf32>
    %c0_46 = arith.constant 0 : index
    %c0_47 = arith.constant 0 : index
    %c0_48 = arith.constant 0 : index
    %c0_49 = arith.constant 0 : index
    %203 = vector.load %arg8[%c0_46, %c0_47, %c0_48, %c0_49] : memref<1x3x8x128xf32, #tpu.memory_space<vmem>>, vector<1x1x8x128xf32>
    %204 = vector.shape_cast %203 : vector<1x1x8x128xf32> to vector<8x128xf32>
    %205 = vector.shape_cast %188 : vector<8x128xf32> to vector<1x1x8x128xf32>
    tpu.vector_store %arg8[%c0_46, %c0_47, %c0_48, %c0_49], %205 {strides = array<i32>} : memref<1x3x8x128xf32, #tpu.memory_space<vmem>>, vector<1x1x8x128xf32>,
    %c0_50 = arith.constant 0 : index
    %c1_51 = arith.constant 1 : index
    %c0_52 = arith.constant 0 : index
    %c0_53 = arith.constant 0 : index
    %206 = vector.load %arg8[%c0_50, %c1_51, %c0_52, %c0_53] : memref<1x3x8x128xf32, #tpu.memory_space<vmem>>, vector<1x1x8x128xf32>
    %207 = vector.shape_cast %206 : vector<1x1x8x128xf32> to vector<8x128xf32>
    %208 = vector.shape_cast %195 : vector<8x128xf32> to vector<1x1x8x128xf32>
    tpu.vector_store %arg8[%c0_50, %c1_51, %c0_52, %c0_53], %208 {strides = array<i32>} : memref<1x3x8x128xf32, #tpu.memory_space<vmem>>, vector<1x1x8x128xf32>,
    %c0_54 = arith.constant 0 : index
    %c2_55 = arith.constant 2 : index
    %c0_56 = arith.constant 0 : index
    %c0_57 = arith.constant 0 : index
    %209 = vector.load %arg8[%c0_54, %c2_55, %c0_56, %c0_57] : memref<1x3x8x128xf32, #tpu.memory_space<vmem>>, vector<1x1x8x128xf32>
    %210 = vector.shape_cast %209 : vector<1x1x8x128xf32> to vector<8x128xf32>
    %211 = vector.shape_cast %202 : vector<8x128xf32> to vector<1x1x8x128xf32>
    tpu.vector_store %arg8[%c0_54, %c2_55, %c0_56, %c0_57], %211 {strides = array<i32>} : memref<1x3x8x128xf32, #tpu.memory_space<vmem>>, vector<1x1x8x128xf32>,
    %c0_58 = arith.constant 0 : index
    %c0_59 = arith.constant 0 : index
    %c0_60 = arith.constant 0 : index
    %c0_61 = arith.constant 0 : index
    %212 = vector.load %arg9[%c0_58, %c0_59, %c0_60, %c0_61] : memref<1x1x8x128xf32, #tpu.memory_space<vmem>>, vector<1x1x8x128xf32>
    %213 = vector.shape_cast %212 : vector<1x1x8x128xf32> to vector<8x128xf32>
    %214 = vector.shape_cast %179#4 : vector<8x128xf32> to vector<1x1x8x128xf32>
    tpu.vector_store %arg9[%c0_58, %c0_59, %c0_60, %c0_61], %214 {strides = array<i32>} : memref<1x1x8x128xf32, #tpu.memory_space<vmem>>, vector<1x1x8x128xf32>,
    %c0_62 = arith.constant 0 : index
    %c0_63 = arith.constant 0 : index
    %c0_64 = arith.constant 0 : index
    %c0_65 = arith.constant 0 : index
    %215 = vector.load %arg10[%c0_62, %c0_63, %c0_64, %c0_65] : memref<1x1x8x128xf32, #tpu.memory_space<vmem>>, vector<1x1x8x128xf32>
    %216 = vector.shape_cast %215 : vector<1x1x8x128xf32> to vector<8x128xf32>
    %217 = vector.shape_cast %179#5 : vector<8x128xf32> to vector<1x1x8x128xf32>
    tpu.vector_store %arg10[%c0_62, %c0_63, %c0_64, %c0_65], %217 {strides = array<i32>} : memref<1x1x8x128xf32, #tpu.memory_space<vmem>>, vector<1x1x8x128xf32>,
    %cst_66 = arith.constant 1.000000e-01 : f32
    %218 = vector.broadcast %cst_66 : f32 to vector<8x128xf32>
    %219 = arith.addf %218, %179#4 : vector<8x128xf32>
    %220 = math.log %219 : vector<8x128xf32>
    %cst_67 = arith.constant 1.100000e+00 : f32
    %221 = vector.broadcast %cst_67 : f32 to vector<8x128xf32>
    %222 = arith.subf %221, %179#4 : vector<8x128xf32>
    %223 = math.log %222 : vector<8x128xf32>
    %224 = arith.addf %220, %223 : vector<8x128xf32>
    %cst_68 = arith.constant 2.207270e+00 : f32
    %225 = vector.broadcast %cst_68 : f32 to vector<8x128xf32>
    %226 = arith.addf %224, %225 : vector<8x128xf32>
    %227 = arith.mulf %78, %226 : vector<8x128xf32>
    %228 = vector.shape_cast %227 : vector<8x128xf32> to vector<1x8x128xf32>
    %cst_69 = arith.constant dense<0.000000e+00> : vector<1xf32>
    %229 = vector.multi_reduction <add>, %228, %cst_69 [1, 2] : vector<1x8x128xf32> to vector<1xf32>
    %230 = vector.shape_cast %229 : vector<1xf32> to vector<1x1x1xf32>
    %231 = vector.extract %230[0, 0, 0] : f32 from vector<1x1x1xf32>
    %c0_70 = arith.constant 0 : index
    %c0_71 = arith.constant 0 : index
    %c0_72 = arith.constant 0 : index
    %c0_73 = arith.constant 0 : index
    %232 = vector.load %arg7[%c0_70, %c0_71, %c0_72, %c0_73] : memref<1x3x8x128xbf16, #tpu.memory_space<vmem>>, vector<1x1x8x128xbf16>
    %233 = vector.shape_cast %232 : vector<1x1x8x128xbf16> to vector<8x128xbf16>
    %234 = arith.extf %233 : vector<8x128xbf16> to vector<8x128xf32>
    %235 = arith.subf %234, %188 : vector<8x128xf32>
    %cst_74 = arith.constant 4.000000e+00 : f32
    %236 = vector.broadcast %cst_74 : f32 to vector<8x128xf32>
    %237 = arith.mulf %235, %236 : vector<8x128xf32>
    %238 = vector.broadcast %65 : f32 to vector<8x128xf32>
    %239 = arith.mulf %238, %78 : vector<8x128xf32>
    %240 = arith.mulf %239, %237 : vector<8x128xf32>
    %241 = arith.mulf %240, %237 : vector<8x128xf32>
    %c0_75 = arith.constant 0 : index
    %c0_76 = arith.constant 0 : index
    %c0_77 = arith.constant 0 : index
    %c0_78 = arith.constant 0 : index
    %242 = vector.load %arg11[%c0_75, %c0_76, %c0_77, %c0_78] : memref<1x3x8x128xf32, #tpu.memory_space<vmem>>, vector<1x1x8x128xf32>
    %243 = vector.shape_cast %242 : vector<1x1x8x128xf32> to vector<8x128xf32>
    %244 = vector.shape_cast %241 : vector<8x128xf32> to vector<1x1x8x128xf32>
    tpu.vector_store %arg11[%c0_75, %c0_76, %c0_77, %c0_78], %244 {strides = array<i32>} : memref<1x3x8x128xf32, #tpu.memory_space<vmem>>, vector<1x1x8x128xf32>,
    %245 = vector.shape_cast %241 : vector<8x128xf32> to vector<1x8x128xf32>
    %cst_79 = arith.constant dense<0.000000e+00> : vector<1xf32>
    %246 = vector.multi_reduction <add>, %245, %cst_79 [1, 2] : vector<1x8x128xf32> to vector<1xf32>
    %247 = vector.shape_cast %246 : vector<1xf32> to vector<1x1x1xf32>
    %248 = vector.extract %247[0, 0, 0] : f32 from vector<1x1x1xf32>
    %cst_80 = arith.constant 0.000000e+00 : f32
    %249 = arith.addf %cst_80, %248 : f32
    %c0_81 = arith.constant 0 : index
    %c1_82 = arith.constant 1 : index
    %c0_83 = arith.constant 0 : index
    %c0_84 = arith.constant 0 : index
    %250 = vector.load %arg7[%c0_81, %c1_82, %c0_83, %c0_84] : memref<1x3x8x128xbf16, #tpu.memory_space<vmem>>, vector<1x1x8x128xbf16>
    %251 = vector.shape_cast %250 : vector<1x1x8x128xbf16> to vector<8x128xbf16>
    %252 = arith.extf %251 : vector<8x128xbf16> to vector<8x128xf32>
    %253 = arith.subf %252, %195 : vector<8x128xf32>
    %cst_85 = arith.constant 4.000000e+00 : f32
    %254 = vector.broadcast %cst_85 : f32 to vector<8x128xf32>
    %255 = arith.mulf %253, %254 : vector<8x128xf32>
    %256 = vector.broadcast %65 : f32 to vector<8x128xf32>
    %257 = arith.mulf %256, %78 : vector<8x128xf32>
    %258 = arith.mulf %257, %255 : vector<8x128xf32>
    %259 = arith.mulf %258, %255 : vector<8x128xf32>
    %c0_86 = arith.constant 0 : index
    %c1_87 = arith.constant 1 : index
    %c0_88 = arith.constant 0 : index
    %c0_89 = arith.constant 0 : index
    %260 = vector.load %arg11[%c0_86, %c1_87, %c0_88, %c0_89] : memref<1x3x8x128xf32, #tpu.memory_space<vmem>>, vector<1x1x8x128xf32>
    %261 = vector.shape_cast %260 : vector<1x1x8x128xf32> to vector<8x128xf32>
    %262 = vector.shape_cast %259 : vector<8x128xf32> to vector<1x1x8x128xf32>
    tpu.vector_store %arg11[%c0_86, %c1_87, %c0_88, %c0_89], %262 {strides = array<i32>} : memref<1x3x8x128xf32, #tpu.memory_space<vmem>>, vector<1x1x8x128xf32>,
    %263 = vector.shape_cast %259 : vector<8x128xf32> to vector<1x8x128xf32>
    %cst_90 = arith.constant dense<0.000000e+00> : vector<1xf32>
    %264 = vector.multi_reduction <add>, %263, %cst_90 [1, 2] : vector<1x8x128xf32> to vector<1xf32>
    %265 = vector.shape_cast %264 : vector<1xf32> to vector<1x1x1xf32>
    %266 = vector.extract %265[0, 0, 0] : f32 from vector<1x1x1xf32>
    %267 = arith.addf %249, %266 : f32
    %c0_91 = arith.constant 0 : index
    %c2_92 = arith.constant 2 : index
    %c0_93 = arith.constant 0 : index
    %c0_94 = arith.constant 0 : index
    %268 = vector.load %arg7[%c0_91, %c2_92, %c0_93, %c0_94] : memref<1x3x8x128xbf16, #tpu.memory_space<vmem>>, vector<1x1x8x128xbf16>
    %269 = vector.shape_cast %268 : vector<1x1x8x128xbf16> to vector<8x128xbf16>
    %270 = arith.extf %269 : vector<8x128xbf16> to vector<8x128xf32>
    %271 = arith.subf %270, %202 : vector<8x128xf32>
    %cst_95 = arith.constant 4.000000e+00 : f32
    %272 = vector.broadcast %cst_95 : f32 to vector<8x128xf32>
    %273 = arith.mulf %271, %272 : vector<8x128xf32>
    %274 = vector.broadcast %65 : f32 to vector<8x128xf32>
    %275 = arith.mulf %274, %78 : vector<8x128xf32>
    %276 = arith.mulf %275, %273 : vector<8x128xf32>
    %277 = arith.mulf %276, %273 : vector<8x128xf32>
    %c0_96 = arith.constant 0 : index
    %c2_97 = arith.constant 2 : index
    %c0_98 = arith.constant 0 : index
    %c0_99 = arith.constant 0 : index
    %278 = vector.load %arg11[%c0_96, %c2_97, %c0_98, %c0_99] : memref<1x3x8x128xf32, #tpu.memory_space<vmem>>, vector<1x1x8x128xf32>
    %279 = vector.shape_cast %278 : vector<1x1x8x128xf32> to vector<8x128xf32>
    %280 = vector.shape_cast %277 : vector<8x128xf32> to vector<1x1x8x128xf32>
    tpu.vector_store %arg11[%c0_96, %c2_97, %c0_98, %c0_99], %280 {strides = array<i32>} : memref<1x3x8x128xf32, #tpu.memory_space<vmem>>, vector<1x1x8x128xf32>,
    %281 = vector.shape_cast %277 : vector<8x128xf32> to vector<1x8x128xf32>
    %cst_100 = arith.constant dense<0.000000e+00> : vector<1xf32>
    %282 = vector.multi_reduction <add>, %281, %cst_100 [1, 2] : vector<1x8x128xf32> to vector<1xf32>
    %283 = vector.shape_cast %282 : vector<1xf32> to vector<1x1x1xf32>
    %284 = vector.extract %283[0, 0, 0] : f32 from vector<1x1x1xf32>
    %285 = arith.addf %267, %284 : f32
    %286 = tpu.iota {dimensions = array<i32: 1>} : vector<1x128xi32>
    %c0_i32_101 = arith.constant 0 : i32
    %287 = vector.broadcast %c0_i32_101 : i32 to vector<1x128xi32>
    %288 = arith.cmpi eq, %286, %287 : vector<1x128xi32>
    %cst_102 = arith.constant 0.000000e+00 : f32
    %289 = vector.broadcast %231 : f32 to vector<1x128xf32>
    %290 = vector.broadcast %cst_102 : f32 to vector<1x128xf32>
    %291 = arith.select %288, %289, %290 : vector<1x128xi1>, vector<1x128xf32>
    %c1_i32_103 = arith.constant 1 : i32
    %292 = vector.broadcast %c1_i32_103 : i32 to vector<1x128xi32>
    %293 = arith.cmpi eq, %286, %292 : vector<1x128xi32>
    %cst_104 = arith.constant 0.000000e+00 : f32
    %294 = vector.broadcast %285 : f32 to vector<1x128xf32>
    %295 = vector.broadcast %cst_104 : f32 to vector<1x128xf32>
    %296 = arith.select %293, %294, %295 : vector<1x128xi1>, vector<1x128xf32>
    %297 = arith.addf %291, %296 : vector<1x128xf32>
    %c0_105 = arith.constant 0 : index
    %c0_106 = arith.constant 0 : index
    %c0_107 = arith.constant 0 : index
    %c0_108 = arith.constant 0 : index
    %298 = vector.load %arg12[%c0_105, %c0_106, %c0_107, %c0_108] : memref<1x1x1x128xf32, #tpu.memory_space<vmem>>, vector<1x1x1x128xf32>
    %299 = vector.shape_cast %298 : vector<1x1x1x128xf32> to vector<1x128xf32>
    %300 = vector.shape_cast %297 : vector<1x128xf32> to vector<1x1x1x128xf32>
    tpu.vector_store %arg12[%c0_105, %c0_106, %c0_107, %c0_108], %300 {strides = array<i32>} : memref<1x1x1x128xf32, #tpu.memory_space<vmem>>, vector<1x1x1x128xf32>,
    return
  }
  func.func @transform_0(%arg0: i32, %arg1: i32) -> i32 {
    %c0_i32 = arith.constant 0 : i32
    %c0_i32_0 = arith.constant 0 : i32
    return %c0_i32 : i32
  }
  func.func @transform_1(%arg0: i32, %arg1: i32) -> (i32, i32) {
    %c0_i32 = arith.constant 0 : i32
    %c0_i32_0 = arith.constant 0 : i32
    %c0_i32_1 = arith.constant 0 : i32
    return %c0_i32, %c0_i32_0 : i32, i32
  }
  func.func @transform_2(%arg0: i32, %arg1: i32) -> (i32, i32, i32, i32) {
    %c0_i32 = arith.constant 0 : i32
    %c0_i32_0 = arith.constant 0 : i32
    %c0_i32_1 = arith.constant 0 : i32
    return %arg0, %c0_i32, %arg1, %c0_i32_0 : i32, i32, i32, i32
  }
  func.func @transform_3(%arg0: i32, %arg1: i32) -> (i32, i32, i32, i32) {
    %c0_i32 = arith.constant 0 : i32
    %c0_i32_0 = arith.constant 0 : i32
    %c0_i32_1 = arith.constant 0 : i32
    return %arg0, %c0_i32, %arg1, %c0_i32_0 : i32, i32, i32, i32
  }
  func.func @transform_4(%arg0: i32, %arg1: i32) -> (i32, i32, i32, i32) {
    %c0_i32 = arith.constant 0 : i32
    %c0_i32_0 = arith.constant 0 : i32
    %c0_i32_1 = arith.constant 0 : i32
    %c0_i32_2 = arith.constant 0 : i32
    return %c0_i32, %c0_i32_0, %arg1, %c0_i32_1 : i32, i32, i32, i32
  }
  func.func @transform_5(%arg0: i32, %arg1: i32) -> (i32, i32, i32, i32) {
    %c0_i32 = arith.constant 0 : i32
    %c0_i32_0 = arith.constant 0 : i32
    %c0_i32_1 = arith.constant 0 : i32
    return %arg0, %c0_i32, %arg1, %c0_i32_0 : i32, i32, i32, i32
  }
  func.func @transform_6(%arg0: i32, %arg1: i32) -> (i32, i32, i32, i32) {
    %c0_i32 = arith.constant 0 : i32
    %c0_i32_0 = arith.constant 0 : i32
    %c0_i32_1 = arith.constant 0 : i32
    return %arg0, %c0_i32, %arg1, %c0_i32_0 : i32, i32, i32, i32
  }
  func.func @transform_7(%arg0: i32, %arg1: i32) -> (i32, i32, i32, i32) {
    %c0_i32 = arith.constant 0 : i32
    %c0_i32_0 = arith.constant 0 : i32
    %c0_i32_1 = arith.constant 0 : i32
    return %arg0, %c0_i32, %arg1, %c0_i32_0 : i32, i32, i32, i32
  }
  func.func @transform_8(%arg0: i32, %arg1: i32) -> (i32, i32, i32, i32) {
    %c0_i32 = arith.constant 0 : i32
    %c0_i32_0 = arith.constant 0 : i32
    %c0_i32_1 = arith.constant 0 : i32
    return %arg0, %c0_i32, %arg1, %c0_i32_0 : i32, i32, i32, i32
  }
  func.func @transform_9(%arg0: i32, %arg1: i32) -> (i32, i32, i32, i32) {
    %c0_i32 = arith.constant 0 : i32
    %c0_i32_0 = arith.constant 0 : i32
    %c0_i32_1 = arith.constant 0 : i32
    return %arg0, %c0_i32, %arg1, %c0_i32_0 : i32, i32, i32, i32
  }
  func.func @transform_10(%arg0: i32, %arg1: i32) -> (i32, i32, i32, i32) {
    %c0_i32 = arith.constant 0 : i32
    %c0_i32_0 = arith.constant 0 : i32
    %c0_i32_1 = arith.constant 0 : i32
    return %arg0, %arg1, %c0_i32, %c0_i32_0 : i32, i32, i32, i32
  }
}

</mosaic_0001>

<llo_original>
// kernel: tpu_custom_call.1
$region0: #{tpu_custom_call.1}
  #allocation0 [shape = 'u32[]', space=smem, size = 0x4, offset = 0x4, fixed_abs, tag = 'smem constant byte address 0x4 - core index']
  #allocation1 [shape = 'u32[144,128]{1,0:T(1,128)}', space=vmem, size = 0x12000, scoped, tag = 'internal scratch']
  #allocation2 [shape = 's32[1]{0:T(128)S(6)}', space=smem, size = 0x200, scoped, tag = 'scoped memory for tpu_custom_call.1']
  %s0 = inlined_call_operand.<no memory space> [shape: s32[1], index: 0, kind: input, shape index: {}]
  %s1 = inlined_call_operand.vmem [shape: f32[2,33], index: 1, kind: input, shape index: {}]
  %s2 = inlined_call_operand.hbm [shape: f32[2,2,8,128], index: 2, kind: input, shape index: {}]
  %s3 = inlined_call_operand.hbm [shape: f32[2,1,8,128], index: 3, kind: input, shape index: {}]
  %s4 = inlined_call_operand.vmem [shape: bf16[1,3,8,128], index: 4, kind: input, shape index: {}]
  %s5 = inlined_call_operand.hbm [shape: bf16[2,3,8,128], index: 5, kind: input, shape index: {}]
  %s6 = inlined_call_operand.hbm [shape: f32[2,3,8,128], index: 6, kind: output, shape index: {0}]
  %s7 = inlined_call_operand.hbm [shape: f32[2,1,8,128], index: 7, kind: output, shape index: {1}]
  %s8 = inlined_call_operand.hbm [shape: f32[2,1,8,128], index: 8, kind: output, shape index: {2}]
  %s9 = inlined_call_operand.hbm [shape: f32[2,3,8,128], index: 9, kind: output, shape index: {3}]
  %s10 = inlined_call_operand.hbm [shape: f32[2,1,1,128], index: 10, kind: output, shape index: {4}]
  %11 = xla_tuple %s6, %s7, %s8, %s9, %s10
  %s12 = sld [smem:[#allocation0]]
  $region112: #{tpu_custom_call.1} parent=0
    _
  %s14 = ssub.s32 1, %s12
  %s15 = scalar_select 0, %s14, %s12
  %16 = sst [smem:[#allocation2]] %s0
  $region1: #{tpu_custom_call.1} parent=0
    #allocation3 [shape = 'u8[1024]{0}', space=smem, size = 0x400, scoped, tag = 'input window, operand 1, single buffered']
    #allocation4 [shape = 's32[2]{0}', space=sflag, size = 0x8, scoped, tag = 'scoped memory for tpu_custom_call.1']
    #allocation5 [shape = 's32[2]{0}', space=sflag, size = 0x8, scoped, tag = 'scoped memory for tpu_custom_call.1']
    #allocation6 [shape = 's32[2]{0}', space=sflag, size = 0x8, scoped, tag = 'scoped memory for tpu_custom_call.1']
    #allocation7 [shape = 'u8[16384]{0}', space=vmem, size = 0x4000, scoped, tag = 'input window, operand 2']
    #allocation8 [shape = 'u8[8192]{0}', space=vmem, size = 0x2000, scoped, tag = 'input window, operand 3']
    #allocation9 [shape = 's32[2]{0}', space=sflag, size = 0x8, scoped, tag = 'scoped memory for tpu_custom_call.1']
    #allocation10 [shape = 'u8[12288]{0}', space=vmem, size = 0x3000, scoped, tag = 'input window, operand 5']
    #allocation11 [shape = 'u8[24576]{0}', space=vmem, size = 0x6000, scoped, tag = 'output window, operand 0']
    #allocation12 [shape = 'u8[8192]{0}', space=vmem, size = 0x2000, scoped, tag = 'output window, operand 1']
    #allocation13 [shape = 's32[2]{0}', space=sflag, size = 0x8, scoped, tag = 'scoped memory for tpu_custom_call.1']
    #allocation14 [shape = 'u8[8192]{0}', space=vmem, size = 0x2000, scoped, tag = 'output window, operand 2']
    #allocation15 [shape = 'u8[24576]{0}', space=vmem, size = 0x6000, scoped, tag = 'output window, operand 3']
    #allocation16 [shape = 's32[2]{0}', space=sflag, size = 0x8, scoped, tag = 'scoped memory for tpu_custom_call.1']
    #allocation17 [shape = 'u8[1024]{0}', space=vmem, size = 0x400, scoped, tag = 'output window, operand 4']
    %17 = vsyncpa [#allocation6], 0
    %18 = vsyncpa [#allocation4], 0
    %s19 = scalar_lea.sflag [#allocation4], 1
    %20 = vsyncpa %s19, 0
    %21 = vsyncpa [#allocation9], 0
    %s22 = scalar_lea.sflag [#allocation9], 1
    %23 = vsyncpa %s22, 0
    %24 = vsyncpa [#allocation5], 0
    %s25 = scalar_lea.sflag [#allocation5], 1
    %26 = vsyncpa %s25, 0
    %27 = vsyncpa [#allocation13], 0
    %s28 = scalar_lea.sflag [#allocation13], 1
    %29 = vsyncpa %s28, 0
    %30 = vsyncpa [#allocation16], 0
    %s31 = scalar_lea.sflag [#allocation16], 1
    %32 = vsyncpa %s31, 0
    loop: start=0, step=1, limit=4
    $region2: #{tpu_custom_call.1} parent=1 // loop_pre_header
      _
    $region3: #{tpu_custom_call.1} parent=1 // loop_header
      %s34 = sphi 0, %s38
      %p35 = scmp.ge.s32.totalorder %s34, 4
      %s41 = sphi 0, %s53
      %s42 = sphi 0, %s49
      %s43 = sphi 0, %s41
      %s44 = sphi 0, %s42
      %s45 = sphi 0, %s43
      %s46 = sphi 0, %s44
      %s54 = sphi 0, %s54
      %s56 = sphi 0, %s54
      %s57 = sphi 0, %s56
      %s71 = sphi 0, %s57
      %s75 = sphi 0, %s75
      %s77 = sphi 0, %s75
      %s78 = sphi 0, %s77
      %s92 = sphi 0, %s78
      %s100 = sphi 0, %s102
      %s103 = sphi 0, %s100
      %s104 = sphi 0, %s103
      %s120 = sphi 0, %s104
      %s128 = sphi 0, %s130
      %s131 = sphi 0, %s128
      %s132 = sphi 0, %s131
      %s148 = sphi 0, %s132
      %s154 = sphi 0, %s156
      %s157 = sphi 0, %s154
      %s158 = sphi 0, %s157
      %s174 = sphi 0, %s158
      %s182 = sphi 0, %s184
      %s185 = sphi 0, %s182
      %s186 = sphi 0, %s185
      %s202 = sphi 0, %s186
      %s210 = sphi 0, %s212
      %s213 = sphi 0, %s210
      %s214 = sphi 0, %s213
      %s230 = sphi 0, %s214
      %s238 = sphi 0, %s240
      %s241 = sphi 0, %s238
      %s242 = sphi 0, %s241
      %s258 = sphi 0, %s242
      %s266 = sphi 0, %s268
      %s269 = sphi 0, %s266
      %s270 = sphi 0, %s269
      %s286 = sphi 0, %s270
      %s294 = sphi 0, %s296
      %s297 = sphi 0, %s294
      %s298 = sphi 0, %s297
      %s314 = sphi 0, %s298
      %s322 = sphi 0, %s324
      %s325 = sphi 0, %s322
      %s326 = sphi 0, %s325
      %s342 = sphi 0, %s326
    $region4: #{tpu_custom_call.1} parent=1 // loop_header_branch
      %37 = sbr.rel (%p35) target = $region8
    $region5: #{tpu_custom_call.1} parent=1 // loop_body
      %s39 = ssub.s32 %s34, 1
      %s40 = ssub.s32 %s34, 2
      %s47 = sadd.s32 1, %s42
      %p48 = scmp.ge.s32.totalorder %s47, 1
      %s49 = scalar_select %p48, 0, %s47
      %s50 = sadd.s32 1, %s41
      %s51 = scalar_select %p48, %s50, %s41
      %p52 = scmp.ge.s32.totalorder %s51, 2
      %s53 = scalar_select %p52, 0, %s51
      %s55 = sadd.s32 %s54, 1
      %p58 = scmp.eq.s32.totalorder %s34, 1
      %p59 = scmp.ne.s32.totalorder %s54, %s56
      %p60 = scmp.eq.s32.totalorder %s34, 0
      %p61 = por %p59, %p60
      %p62 = scmp.ne.s32.totalorder %s54, %s56
      %p63 = scmp.eq.s32.totalorder %s39, 1
      %p64 = por %p62, %p63
      %p65 = scmp.ne.s32.totalorder %s56, %s57
      %p66 = scmp.eq.s32.totalorder %s39, 0
      %p67 = por %p65, %p66
      %p68 = scmp.ne.s32.totalorder %s56, %s57
      %p69 = scmp.eq.s32.totalorder %s40, 1
      %p70 = por %p68, %p69
      %p72 = scmp.ne.s32.totalorder %s57, %s71
      %p73 = scmp.eq.s32.totalorder %s40, 0
      %p74 = por %p72, %p73
      %s76 = sadd.s32 %s75, 1
      %p79 = scmp.eq.s32.totalorder %s34, 1
      %p80 = scmp.ne.s32.totalorder %s75, %s77
      %p81 = scmp.eq.s32.totalorder %s34, 0
      %p82 = por %p80, %p81
      %p83 = scmp.ne.s32.totalorder %s75, %s77
      %p84 = scmp.eq.s32.totalorder %s39, 1
      %p85 = por %p83, %p84
      %p86 = scmp.ne.s32.totalorder %s77, %s78
      %p87 = scmp.eq.s32.totalorder %s39, 0
      %p88 = por %p86, %p87
      %p89 = scmp.ne.s32.totalorder %s77, %s78
      %p90 = scmp.eq.s32.totalorder %s40, 1
      %p91 = por %p89, %p90
      %p93 = scmp.ne.s32.totalorder %s78, %s92
      %p94 = scmp.eq.s32.totalorder %s40, 0
      %p95 = por %p93, %p94
      %s96 = ssub.s32 %s41, %s53
      %s97 = ssub.s32 %s42, %s49
      %s98 = sor.u32 %s96, %s97
      %p99 = scmp.eq.s32.totalorder %s98, 0
      %s101 = sadd.s32 %s100, 1
      %s102 = scalar_select %p99, %s100, %s101
      %p105 = pneg %p99
      %p106 = scmp.eq.s32.totalorder %s34, 1
      %p107 = por %p105, %p106
      %p108 = scmp.ne.s32.totalorder %s100, %s103
      %p109 = scmp.eq.s32.totalorder %s34, 0
      %p110 = por %p108, %p109
      %p111 = scmp.ne.s32.totalorder %s100, %s103
      %p112 = scmp.eq.s32.totalorder %s39, 1
      %p113 = por %p111, %p112
      %p114 = scmp.ne.s32.totalorder %s103, %s104
      %p115 = scmp.eq.s32.totalorder %s39, 0
      %p116 = por %p114, %p115
      %p117 = scmp.ne.s32.totalorder %s103, %s104
      %p118 = scmp.eq.s32.totalorder %s40, 1
      %p119 = por %p117, %p118
      %p121 = scmp.ne.s32.totalorder %s104, %s120
      %p122 = scmp.eq.s32.totalorder %s40, 0
      %p123 = por %p121, %p122
      %s124 = ssub.s32 %s41, %s53
      %s125 = ssub.s32 %s42, %s49
      %s126 = sor.u32 %s124, %s125
      %p127 = scmp.eq.s32.totalorder %s126, 0
      %s129 = sadd.s32 %s128, 1
      %s130 = scalar_select %p127, %s128, %s129
      %p133 = pneg %p127
      %p134 = scmp.eq.s32.totalorder %s34, 1
      %p135 = por %p133, %p134
      %p136 = scmp.ne.s32.totalorder %s128, %s131
      %p137 = scmp.eq.s32.totalorder %s34, 0
      %p138 = por %p136, %p137
      %p139 = scmp.ne.s32.totalorder %s128, %s131
      %p140 = scmp.eq.s32.totalorder %s39, 1
      %p141 = por %p139, %p140
      %p142 = scmp.ne.s32.totalorder %s131, %s132
      %p143 = scmp.eq.s32.totalorder %s39, 0
      %p144 = por %p142, %p143
      %p145 = scmp.ne.s32.totalorder %s131, %s132
      %p146 = scmp.eq.s32.totalorder %s40, 1
      %p147 = por %p145, %p146
      %p149 = scmp.ne.s32.totalorder %s132, %s148
      %p150 = scmp.eq.s32.totalorder %s40, 0
      %p151 = por %p149, %p150
      %s152 = ssub.s32 %s42, %s49
      %p153 = scmp.eq.s32.totalorder %s152, 0
      %s155 = sadd.s32 %s154, 1
      %s156 = scalar_select %p153, %s154, %s155
      %p159 = pneg %p153
      %p160 = scmp.eq.s32.totalorder %s34, 1
      %p161 = por %p159, %p160
      %p162 = scmp.ne.s32.totalorder %s154, %s157
      %p163 = scmp.eq.s32.totalorder %s34, 0
      %p164 = por %p162, %p163
      %p165 = scmp.ne.s32.totalorder %s154, %s157
      %p166 = scmp.eq.s32.totalorder %s39, 1
      %p167 = por %p165, %p166
      %p168 = scmp.ne.s32.totalorder %s157, %s158
      %p169 = scmp.eq.s32.totalorder %s39, 0
      %p170 = por %p168, %p169
      %p171 = scmp.ne.s32.totalorder %s157, %s158
      %p172 = scmp.eq.s32.totalorder %s40, 1
      %p173 = por %p171, %p172
      %p175 = scmp.ne.s32.totalorder %s158, %s174
      %p176 = scmp.eq.s32.totalorder %s40, 0
      %p177 = por %p175, %p176
      %s178 = ssub.s32 %s41, %s53
      %s179 = ssub.s32 %s42, %s49
      %s180 = sor.u32 %s178, %s179
      %p181 = scmp.eq.s32.totalorder %s180, 0
      %s183 = sadd.s32 %s182, 1
      %s184 = scalar_select %p181, %s182, %s183
      %p187 = pneg %p181
      %p188 = scmp.eq.s32.totalorder %s34, 1
      %p189 = por %p187, %p188
      %p190 = scmp.ne.s32.totalorder %s182, %s185
      %p191 = scmp.eq.s32.totalorder %s34, 0
      %p192 = por %p190, %p191
      %p193 = scmp.ne.s32.totalorder %s182, %s185
      %p194 = scmp.eq.s32.totalorder %s39, 1
      %p195 = por %p193, %p194
      %p196 = scmp.ne.s32.totalorder %s185, %s186
      %p197 = scmp.eq.s32.totalorder %s39, 0
      %p198 = por %p196, %p197
      %p199 = scmp.ne.s32.totalorder %s185, %s186
      %p200 = scmp.eq.s32.totalorder %s40, 1
      %p201 = por %p199, %p200
      %p203 = scmp.ne.s32.totalorder %s186, %s202
      %p204 = scmp.eq.s32.totalorder %s40, 0
      %p205 = por %p203, %p204
      %s206 = ssub.s32 %s41, %s53
      %s207 = ssub.s32 %s42, %s49
      %s208 = sor.u32 %s206, %s207
      %p209 = scmp.eq.s32.totalorder %s208, 0
      %s211 = sadd.s32 %s210, 1
      %s212 = scalar_select %p209, %s210, %s211
      %p215 = pneg %p209
      %p216 = scmp.eq.s32.totalorder %s34, 1
      %p217 = por %p215, %p216
      %p218 = scmp.ne.s32.totalorder %s210, %s213
      %p219 = scmp.eq.s32.totalorder %s34, 0
      %p220 = por %p218, %p219
      %p221 = scmp.ne.s32.totalorder %s210, %s213
      %p222 = scmp.eq.s32.totalorder %s39, 1
      %p223 = por %p221, %p222
      %p224 = scmp.ne.s32.totalorder %s213, %s214
      %p225 = scmp.eq.s32.totalorder %s39, 0
      %p226 = por %p224, %p225
      %p227 = scmp.ne.s32.totalorder %s213, %s214
      %p228 = scmp.eq.s32.totalorder %s40, 1
      %p229 = por %p227, %p228
      %p231 = scmp.ne.s32.totalorder %s214, %s230
      %p232 = scmp.eq.s32.totalorder %s40, 0
      %p233 = por %p231, %p232
      %s234 = ssub.s32 %s41, %s53
      %s235 = ssub.s32 %s42, %s49
      %s236 = sor.u32 %s234, %s235
      %p237 = scmp.eq.s32.totalorder %s236, 0
      %s239 = sadd.s32 %s238, 1
      %s240 = scalar_select %p237, %s238, %s239
      %p243 = pneg %p237
      %p244 = scmp.eq.s32.totalorder %s34, 1
      %p245 = por %p243, %p244
      %p246 = scmp.ne.s32.totalorder %s238, %s241
      %p247 = scmp.eq.s32.totalorder %s34, 0
      %p248 = por %p246, %p247
      %p249 = scmp.ne.s32.totalorder %s238, %s241
      %p250 = scmp.eq.s32.totalorder %s39, 1
      %p251 = por %p249, %p250
      %p252 = scmp.ne.s32.totalorder %s241, %s242
      %p253 = scmp.eq.s32.totalorder %s39, 0
      %p254 = por %p252, %p253
      %p255 = scmp.ne.s32.totalorder %s241, %s242
      %p256 = scmp.eq.s32.totalorder %s40, 1
      %p257 = por %p255, %p256
      %p259 = scmp.ne.s32.totalorder %s242, %s258
      %p260 = scmp.eq.s32.totalorder %s40, 0
      %p261 = por %p259, %p260
      %s262 = ssub.s32 %s41, %s53
      %s263 = ssub.s32 %s42, %s49
      %s264 = sor.u32 %s262, %s263
      %p265 = scmp.eq.s32.totalorder %s264, 0
      %s267 = sadd.s32 %s266, 1
      %s268 = scalar_select %p265, %s266, %s267
      %p271 = pneg %p265
      %p272 = scmp.eq.s32.totalorder %s34, 1
      %p273 = por %p271, %p272
      %p274 = scmp.ne.s32.totalorder %s266, %s269
      %p275 = scmp.eq.s32.totalorder %s34, 0
      %p276 = por %p274, %p275
      %p277 = scmp.ne.s32.totalorder %s266, %s269
      %p278 = scmp.eq.s32.totalorder %s39, 1
      %p279 = por %p277, %p278
      %p280 = scmp.ne.s32.totalorder %s269, %s270
      %p281 = scmp.eq.s32.totalorder %s39, 0
      %p282 = por %p280, %p281
      %p283 = scmp.ne.s32.totalorder %s269, %s270
      %p284 = scmp.eq.s32.totalorder %s40, 1
      %p285 = por %p283, %p284
      %p287 = scmp.ne.s32.totalorder %s270, %s286
      %p288 = scmp.eq.s32.totalorder %s40, 0
      %p289 = por %p287, %p288
      %s290 = ssub.s32 %s41, %s53
      %s291 = ssub.s32 %s42, %s49
      %s292 = sor.u32 %s290, %s291
      %p293 = scmp.eq.s32.totalorder %s292, 0
      %s295 = sadd.s32 %s294, 1
      %s296 = scalar_select %p293, %s294, %s295
      %p299 = pneg %p293
      %p300 = scmp.eq.s32.totalorder %s34, 1
      %p301 = por %p299, %p300
      %p302 = scmp.ne.s32.totalorder %s294, %s297
      %p303 = scmp.eq.s32.totalorder %s34, 0
      %p304 = por %p302, %p303
      %p305 = scmp.ne.s32.totalorder %s294, %s297
      %p306 = scmp.eq.s32.totalorder %s39, 1
      %p307 = por %p305, %p306
      %p308 = scmp.ne.s32.totalorder %s297, %s298
      %p309 = scmp.eq.s32.totalorder %s39, 0
      %p310 = por %p308, %p309
      %p311 = scmp.ne.s32.totalorder %s297, %s298
      %p312 = scmp.eq.s32.totalorder %s40, 1
      %p313 = por %p311, %p312
      %p315 = scmp.ne.s32.totalorder %s298, %s314
      %p316 = scmp.eq.s32.totalorder %s40, 0
      %p317 = por %p315, %p316
      %s318 = ssub.s32 %s41, %s53
      %s319 = ssub.s32 %s42, %s49
      %s320 = sor.u32 %s318, %s319
      %p321 = scmp.eq.s32.totalorder %s320, 0
      %s323 = sadd.s32 %s322, 1
      %s324 = scalar_select %p321, %s322, %s323
      %p327 = pneg %p321
      %p328 = scmp.eq.s32.totalorder %s34, 1
      %p329 = por %p327, %p328
      %p330 = scmp.ne.s32.totalorder %s322, %s325
      %p331 = scmp.eq.s32.totalorder %s34, 0
      %p332 = por %p330, %p331
      %p333 = scmp.ne.s32.totalorder %s322, %s325
      %p334 = scmp.eq.s32.totalorder %s39, 1
      %p335 = por %p333, %p334
      %p336 = scmp.ne.s32.totalorder %s325, %s326
      %p337 = scmp.eq.s32.totalorder %s39, 0
      %p338 = por %p336, %p337
      %p339 = scmp.ne.s32.totalorder %s325, %s326
      %p340 = scmp.eq.s32.totalorder %s40, 1
      %p341 = por %p339, %p340
      %p343 = scmp.ne.s32.totalorder %s326, %s342
      %p344 = scmp.eq.s32.totalorder %s40, 0
      %p345 = por %p343, %p344
      %p346 = scmp.le.s32.totalorder 1, %s34
      %p347 = scmp.lt.s32.totalorder %s34, 3
      %p348 = pnand %p346, %p347
      %p349 = pneg %p348
      // Predicated region
      $region9: #{tpu_custom_call.1} parent=5 // pred_check
        _
      $region10: #{tpu_custom_call.1} parent=5 // pred_check_branch
        %351 = sbr.rel (%p348) target = $region12
      $region11: #{tpu_custom_call.1} parent=5 // pred_region
        %s352 = ssub.s32 %s34, 1
        // Predicated region
        $region13: #{tpu_custom_call.1} parent=11 // pred_check
          %p353 = pneg %p67
        $region14: #{tpu_custom_call.1} parent=11 // pred_check_branch
          %355 = sbr.rel (%p353) target = $region16
        $region15: #{tpu_custom_call.1} parent=11 // pred_region
          _
        $region16: #{tpu_custom_call.1} parent=11 // pred_fallthru
          _
        // Predicated region
        $region17: #{tpu_custom_call.1} parent=11 // pred_check
          %p356 = pneg %p88
        $region18: #{tpu_custom_call.1} parent=11 // pred_check_branch
          %358 = sbr.rel (%p356) target = $region20
        $region19: #{tpu_custom_call.1} parent=11 // pred_region
          %s360 = ssub.s32 32, 32
          %361 = vsyncadd [#allocation6], %s360
          %s363 = sshll.u32 %s1, 4
          %s364 = int_to_ptr.vmem [resolvable:$true] %s363
          %366 = dma.vmem_to_smem %s364, 32, [#allocation3], [#allocation6]
        $region20: #{tpu_custom_call.1} parent=11 // pred_fallthru
          _
        // Predicated region
        $region21: #{tpu_custom_call.1} parent=11 // pred_check
          %p367 = pneg %p170
        $region22: #{tpu_custom_call.1} parent=11 // pred_check_branch
          %369 = sbr.rel (%p367) target = $region24
        $region23: #{tpu_custom_call.1} parent=11 // pred_region
          %p370 = scmp.lt.s32.totalorder %s44, 0
          %s371 = scalar_select %p370, %s44, 0
          %s372 = smul.addr %s371, 4
          %s373 = scalar_lea.vmem %s4, %s372
        $region24: #{tpu_custom_call.1} parent=11 // pred_fallthru
          _
      $region12: #{tpu_custom_call.1} parent=5 // pred_fallthru
        _
      %p374 = scmp.lt.s32.totalorder %s34, 2
      // Predicated region
      $region25: #{tpu_custom_call.1} parent=5 // pred_check
        %p375 = pneg %p374
      $region26: #{tpu_custom_call.1} parent=5 // pred_check_branch
        %377 = sbr.rel (%p375) target = $region28
      $region27: #{tpu_custom_call.1} parent=5 // pred_region
        // Predicated region
        $region29: #{tpu_custom_call.1} parent=27 // pred_check
          %p378 = pneg %p110
        $region30: #{tpu_custom_call.1} parent=27 // pred_check_branch
          %380 = sbr.rel (%p378) target = $region32
        $region31: #{tpu_custom_call.1} parent=27 // pred_region
          %s381 = sand.u32 %s100, 1
          %s382 = scalar_lea.sflag [#allocation4], %s381
          %s383 = sand.u32 %s100, 1
          %s384 = smul.addr %s383, 16
          %s385 = scalar_lea.vmem [#allocation7], %s384
          %s387 = ssub.s32 256, 256
          %388 = vsyncadd %s382, %s387
          %s389 = smul.addr %s41, 2
          %s390 = sadd.s32 %s42, %s389
          %s391 = smul.addr %s390, 128
          %s392 = scalar_lea.hbm %s2, %s391
          %s393 = sshll.u32 %s385, 4
          %s394 = int_to_ptr.vmem [resolvable:$true] %s393
          %399 = dma.hbm_to_vmem [thread:$0]  %s392, 256, %s394, %s382, 128, 128, 8
        $region32: #{tpu_custom_call.1} parent=27 // pred_fallthru
          _
        // Predicated region
        $region33: #{tpu_custom_call.1} parent=27 // pred_check
          %p400 = pneg %p138
        $region34: #{tpu_custom_call.1} parent=27 // pred_check_branch
          %402 = sbr.rel (%p400) target = $region36
        $region35: #{tpu_custom_call.1} parent=27 // pred_region
          %s403 = sand.u32 %s34, 1
          %s404 = scalar_lea.sflag [#allocation9], %s403
          %s405 = sand.u32 %s128, 1
          %s406 = smul.addr %s405, 8
          %s407 = scalar_lea.vmem [#allocation8], %s406
          %s409 = ssub.s32 128, 128
          %410 = vsyncadd %s404, %s409
          %s411 = sadd.s32 %s42, %s41
          %s412 = smul.addr %s411, 128
          %s413 = scalar_lea.hbm %s3, %s412
          %s415 = sshll.u32 %s407, 4
          %s416 = int_to_ptr.vmem [resolvable:$true] %s415
          %418 = dma.hbm_to_vmem [thread:$0]  %s413, 128, %s416, %s404
        $region36: #{tpu_custom_call.1} parent=27 // pred_fallthru
          _
        // Predicated region
        $region37: #{tpu_custom_call.1} parent=27 // pred_check
          %p419 = pneg %p192
        $region38: #{tpu_custom_call.1} parent=27 // pred_check_branch
          %421 = sbr.rel (%p419) target = $region40
        $region39: #{tpu_custom_call.1} parent=27 // pred_region
          %s422 = sand.u32 %s34, 1
          %s423 = scalar_lea.sflag [#allocation9], %s422
          %s424 = sand.u32 %s182, 1
          %s425 = smul.addr %s424, 12
          %s426 = scalar_lea.vmem [#allocation10], %s425
          %s428 = ssub.s32 192, 192
          %429 = vsyncadd %s423, %s428
          %s430 = smul.addr %s41, 3
          %s431 = sadd.s32 %s42, %s430
          %s432 = smul.addr %s431, 64
          %s433 = scalar_lea.hbm %s5, %s432
          %s434 = sshll.u32 %s426, 4
          %s435 = int_to_ptr.vmem [resolvable:$true] %s434
          %440 = dma.hbm_to_vmem [thread:$0]  %s433, 192, %s435, %s423, 64, 64, 4
        $region40: #{tpu_custom_call.1} parent=27 // pred_fallthru
          _
      $region28: #{tpu_custom_call.1} parent=5 // pred_fallthru
        _
      %p441 = scmp.le.s32.totalorder 1, %s34
      %p442 = scmp.lt.s32.totalorder %s34, 3
      %p443 = pnand %p441, %p442
      %p444 = pneg %p443
      // Predicated region
      $region41: #{tpu_custom_call.1} parent=5 // pred_check
        _
      $region42: #{tpu_custom_call.1} parent=5 // pred_check_branch
        %446 = sbr.rel (%p443) target = $region44
      $region43: #{tpu_custom_call.1} parent=5 // pred_region
        %s447 = ssub.s32 %s34, 1
        // Predicated region
        $region45: #{tpu_custom_call.1} parent=43 // pred_check
          %p448 = pneg %p88
        $region46: #{tpu_custom_call.1} parent=43 // pred_check_branch
          %450 = sbr.rel (%p448) target = $region48
        $region47: #{tpu_custom_call.1} parent=43 // pred_region
          %451 = dma.done [#allocation6], 32
        $region48: #{tpu_custom_call.1} parent=43 // pred_fallthru
          _
        %s452 = sand.u32 %s103, 1
        %s453 = scalar_lea.sflag [#allocation4], %s452
        %s454 = sand.u32 %s103, 1
        %s455 = smul.addr %s454, 16
        %s456 = scalar_lea.vmem [#allocation7], %s455
        // Predicated region
        $region49: #{tpu_custom_call.1} parent=43 // pred_check
          %p457 = pneg %p116
        $region50: #{tpu_custom_call.1} parent=43 // pred_check_branch
          %459 = sbr.rel (%p457) target = $region52
        $region51: #{tpu_custom_call.1} parent=43 // pred_region
          %460 = dma.done %s453, 256
        $region52: #{tpu_custom_call.1} parent=43 // pred_fallthru
          _
        %s461 = sand.u32 %s39, 1
        %s462 = scalar_lea.sflag [#allocation9], %s461
        %s463 = sand.u32 %s131, 1
        %s464 = smul.addr %s463, 8
        %s465 = scalar_lea.vmem [#allocation8], %s464
        // Predicated region
        $region53: #{tpu_custom_call.1} parent=43 // pred_check
          %p466 = pneg %p144
        $region54: #{tpu_custom_call.1} parent=43 // pred_check_branch
          %468 = sbr.rel (%p466) target = $region56
        $region55: #{tpu_custom_call.1} parent=43 // pred_region
          %469 = dma.done %s462, 128
        $region56: #{tpu_custom_call.1} parent=43 // pred_fallthru
          _
        %s470 = sand.u32 %s39, 1
        %s471 = scalar_lea.sflag [#allocation9], %s470
        %s472 = sand.u32 %s185, 1
        %s473 = smul.addr %s472, 12
        %s474 = scalar_lea.vmem [#allocation10], %s473
        // Predicated region
        $region57: #{tpu_custom_call.1} parent=43 // pred_check
          %p475 = pneg %p198
        $region58: #{tpu_custom_call.1} parent=43 // pred_check_branch
          %477 = sbr.rel (%p475) target = $region60
        $region59: #{tpu_custom_call.1} parent=43 // pred_region
          %478 = dma.done %s471, 192
        $region60: #{tpu_custom_call.1} parent=43 // pred_fallthru
          _
        %479 = sfence
        %p480 = pneg %p67
        %p481 = pneg %p64
        %p482 = pneg %p88
        %p483 = pneg %p85
        %s484 = sand.u32 %s103, 1
        %s485 = scalar_lea.sflag [#allocation4], %s484
        %s486 = sand.u32 %s103, 1
        %s487 = smul.addr %s486, 16
        %s488 = scalar_lea.vmem [#allocation7], %s487
        %p489 = pneg %p116
        %p490 = pneg %p113
        %s491 = sand.u32 %s39, 1
        %s492 = scalar_lea.sflag [#allocation9], %s491
        %s493 = sand.u32 %s131, 1
        %s494 = smul.addr %s493, 8
        %s495 = scalar_lea.vmem [#allocation8], %s494
        %p496 = pneg %p144
        %p497 = pneg %p141
        %p498 = scmp.lt.s32.totalorder %s44, 0
        %s499 = scalar_select %p498, %s44, 0
        %s500 = smul.addr %s499, 4
        %s501 = scalar_lea.vmem %s4, %s500
        %p502 = pneg %p170
        %p503 = pneg %p167
        %s504 = sand.u32 %s39, 1
        %s505 = scalar_lea.sflag [#allocation9], %s504
        %s506 = sand.u32 %s185, 1
        %s507 = smul.addr %s506, 12
        %s508 = scalar_lea.vmem [#allocation10], %s507
        %p509 = pneg %p198
        %p510 = pneg %p195
        %p511 = pneg %p226
        %p512 = pneg %p223
        %s513 = sand.u32 %s213, 1
        %s514 = scalar_lea.sflag [#allocation5], %s513
        %s515 = sand.u32 %s213, 1
        %s516 = smul.addr %s515, 24
        %s517 = scalar_lea.vmem [#allocation11], %s516
        %p518 = pneg %p254
        %p519 = pneg %p251
        %s520 = sand.u32 %s39, 1
        %s521 = scalar_lea.sflag [#allocation13], %s520
        %s522 = sand.u32 %s241, 1
        %s523 = smul.addr %s522, 8
        %s524 = scalar_lea.vmem [#allocation12], %s523
        %p525 = pneg %p282
        %p526 = pneg %p279
        %s527 = sand.u32 %s39, 1
        %s528 = scalar_lea.sflag [#allocation13], %s527
        %s529 = sand.u32 %s269, 1
        %s530 = smul.addr %s529, 8
        %s531 = scalar_lea.vmem [#allocation14], %s530
        %p532 = pneg %p310
        %p533 = pneg %p307
        %s534 = sand.u32 %s39, 1
        %s535 = scalar_lea.sflag [#allocation16], %s534
        %s536 = sand.u32 %s297, 1
        %s537 = smul.addr %s536, 24
        %s538 = scalar_lea.vmem [#allocation15], %s537
        %p539 = pneg %p338
        %p540 = pneg %p335
        %s541 = sand.u32 %s39, 1
        %s542 = scalar_lea.sflag [#allocation16], %s541
        %s543 = sand.u32 %s325, 1
        %s544 = scalar_lea.vmem [#allocation17], %s543
        %p545 = scmp.lt.s32.totalorder %s44, 0
        %s546 = scalar_select %p545, %s44, 0
        %s547 = smul.addr %s546, 4
        %s548 = scalar_lea.vmem %s4, %s547
        %s549 = smul.u32 %s43, 128
        %s550 = sld [smem:[#allocation3 + %s549]]
        %s551 = sadd.s32 %s549, 1
        %s552 = sld [smem:[#allocation3 + %s551]]
        %s553 = sadd.s32 %s549, 2
        %s554 = sld [smem:[#allocation3 + %s553]]
        %s555 = sadd.s32 %s549, 3
        %s556 = sld [smem:[#allocation3 + %s555]]
        %s557 = sadd.s32 %s549, 4
        %s558 = sld [smem:[#allocation3 + %s557]]
        %s559 = sadd.s32 %s549, 5
        %s560 = sld [smem:[#allocation3 + %s559]]
        %s561 = sadd.s32 %s549, 6
        %s562 = sld [smem:[#allocation3 + %s561]]
        %s563 = sadd.s32 %s549, 7
        %s564 = sld [smem:[#allocation3 + %s563]]
        %s565 = sadd.s32 %s549, 8
        %s566 = sld [smem:[#allocation3 + %s565]]
        %s567 = sadd.s32 %s549, 9
        %s568 = sld [smem:[#allocation3 + %s567]]
        %s569 = sadd.s32 %s549, 10
        %s570 = sld [smem:[#allocation3 + %s569]]
        %s571 = sadd.s32 %s549, 11
        %s572 = sld [smem:[#allocation3 + %s571]]
        %s573 = sadd.s32 %s549, 12
        %s574 = sld [smem:[#allocation3 + %s573]]
        %s575 = sadd.s32 %s549, 13
        %s576 = sld [smem:[#allocation3 + %s575]]
        %s577 = sadd.s32 %s549, 14
        %s578 = sld [smem:[#allocation3 + %s577]]
        %s579 = sadd.s32 %s549, 15
        %s580 = sld [smem:[#allocation3 + %s579]]
        %s581 = sadd.s32 %s549, 16
        %s582 = sld [smem:[#allocation3 + %s581]]
        %s583 = sadd.s32 %s549, 17
        %s584 = sld [smem:[#allocation3 + %s583]]
        %s585 = sadd.s32 %s549, 18
        %s586 = sld [smem:[#allocation3 + %s585]]
        %s587 = sadd.s32 %s549, 19
        %s588 = sld [smem:[#allocation3 + %s587]]
        %s589 = sadd.s32 %s549, 20
        %s590 = sld [smem:[#allocation3 + %s589]]
        %s591 = sadd.s32 %s549, 21
        %s592 = sld [smem:[#allocation3 + %s591]]
        %s593 = sadd.s32 %s549, 22
        %s594 = sld [smem:[#allocation3 + %s593]]
        %s595 = sadd.s32 %s549, 23
        %s596 = sld [smem:[#allocation3 + %s595]]
        %s597 = sadd.s32 %s549, 24
        %s598 = sld [smem:[#allocation3 + %s597]]
        %s599 = sadd.s32 %s549, 25
        %s600 = sld [smem:[#allocation3 + %s599]]
        %s601 = sadd.s32 %s549, 26
        %s602 = sld [smem:[#allocation3 + %s601]]
        %s603 = sadd.s32 %s549, 27
        %s604 = sld [smem:[#allocation3 + %s603]]
        %s605 = sadd.s32 %s549, 28
        %s606 = sld [smem:[#allocation3 + %s605]]
        %s607 = sadd.s32 %s549, 29
        %s608 = sld [smem:[#allocation3 + %s607]]
        %s609 = sadd.s32 %s549, 30
        %s610 = sld [smem:[#allocation3 + %s609]]
        %s611 = sadd.s32 %s549, 31
        %s612 = sld [smem:[#allocation3 + %s611]]
        %s613 = sadd.s32 %s549, 32
        %s614 = sld [smem:[#allocation3 + %s613]]
        %s615 = sld [smem:[#allocation2]]
        %v616 = vlaneseq
        %v617 = vshrl.u32 %v616, 7
        %v618 = vlaneseq
        %v619 = vand.u32 %v618, 127
        %s620 = smul.u32 %s44, 8
        %v621 = vstv %s620
        %v622 = vadd.s32 %v621, %v617
        %v623 = vmul.u32 %v622, 128
        %v624 = vadd.s32 %v623, %v619
        %vm625 = vcmp.lt.s32.totalorder %v624, 256
        %v626 = vsel %vm625, 1, 0
        %v627 = vcvt.s32.f32 %v626
        %v628 = vld [vmem:[%s465] sm:$0xff]
        %v629 = vld [vmem:[%s456] sm:$0xff]
        %v630 = vstv %s578
        %v631 = vsub.f32 %v629, %v630
        %v632 = vstv %s574
        %v633 = vrcp.pop %v632
        %v634 = vmul.f32 %v631, %v633
        %s635 = scalar_lea.vmem %s456, 8 [#allocation7]
        %v636 = vld [vmem:[%s635] sm:$0xff]
        %v637 = vstv %s580
        %v638 = vsub.f32 %v636, %v637
        %v639 = vstv %s576
        %v640 = vrcp.pop %v639
        %v641 = vmul.f32 %v638, %v640
        %v642 = vstv %s550
        %v643 = vmul.f32 %v642, %v634
        %v644 = vstv %s556
        %v645 = vmul.f32 %v644, %v641
        %v646 = vadd.f32 %v643, %v645
        %v647 = vstv %s562
        %v648 = vadd.f32 %v646, %v647
        %v649 = vstv %s552
        %v650 = vmul.f32 %v649, %v634
        %v651 = vstv %s558
        %v652 = vmul.f32 %v651, %v641
        %v653 = vadd.f32 %v650, %v652
        %v654 = vstv %s564
        %v655 = vadd.f32 %v653, %v654
        %v656 = vstv %s554
        %v657 = vmul.f32 %v656, %v634
        %v658 = vstv %s560
        %v659 = vmul.f32 %v658, %v641
        %v660 = vadd.f32 %v657, %v659
        %v661 = vstv %s566
        %v662 = vadd.f32 %v660, %v661
        %v663 = vmul.f32 %v648, %v648
        %v664 = vmul.f32 %v655, %v655
        %v665 = vadd.f32 %v663, %v664
        %v666 = vmul.f32 %v662, %v662
        %v667 = vadd.f32 %v665, %v666
        %v668 = vrsqrt.pop %v667
        %v669 = vmul.f32 %v648, %v668
        %v670 = vmul.f32 %v655, %v668
        %v671 = vmul.f32 %v662, %v668
        %vm672 = vcmp.eq.f32.partialorder %v669, 0.0
        %v673 = vsel %vm672, 1e-12, %v669
        %s674 = ssub.f32 -1.0, %s568
        %v675 = vstv %s674
        %v676 = vrcp.pop %v673
        %v677 = vmul.f32 %v675, %v676
        %s678 = ssub.f32 1.0, %s568
        %v679 = vstv %s678
        %v680 = vmul.f32 %v679, %v676
        %v681 = vmin.f32 %v677, %v680
        %v682 = vmax.f32 %v677, %v680
        %vm683 = vcmp.eq.f32.partialorder %v670, 0.0
        %v684 = vsel %vm683, 1e-12, %v670
        %s685 = ssub.f32 -1.0, %s570
        %v686 = vstv %s685
        %v687 = vrcp.pop %v684
        %v688 = vmul.f32 %v686, %v687
        %s689 = ssub.f32 1.0, %s570
        %v690 = vstv %s689
        %v691 = vmul.f32 %v690, %v687
        %v692 = vmin.f32 %v688, %v691
        %v693 = vmax.f32 %v688, %v691
        %v694 = vmax.f32 %v681, %v692
        %v695 = vmin.f32 %v682, %v693
        %vm696 = vcmp.eq.f32.partialorder %v671, 0.0
        %v697 = vsel %vm696, 1e-12, %v671
        %s698 = ssub.f32 -1.0, %s572
        %v699 = vstv %s698
        %v700 = vrcp.pop %v697
        %v701 = vmul.f32 %v699, %v700
        %s702 = ssub.f32 1.0, %s572
        %v703 = vstv %s702
        %v704 = vmul.f32 %v703, %v700
        %v705 = vmin.f32 %v701, %v704
        %v706 = vmax.f32 %v701, %v704
        %v707 = vmax.f32 %v694, %v705
        %v708 = vmin.f32 %v695, %v706
        %vm709 = vcmp.lt.f32.partialorder %v707, %v708
        %v710 = vsel %vm709, %v707, 0.0
        %v711 = vmax.f32 %v710, 0.0
        %v712 = vmul.f32 %v628, 0.1
        %v713 = vsub.f32 %v711, %v712
        %vm714 = vmand %vm709, %vm625
        %v715 = vsel %vm714, %v707, 1.0
        %v716 = vsel %vm714, %v708, 0.0
        // While loop
        $region61: #{tpu_custom_call.1} parent=43 // loop_pre_header
          _
        $region62: #{tpu_custom_call.1} parent=43 // loop_header
          %s718 = sphi 0, %s720
          %p719 = scmp.ge.s32.totalorder %s718, %s615
          %v723 = vphi %v713, %v836
          %v724 = vphi 0.0, %v825
          %v725 = vphi 0.0, %v827
          %v726 = vphi 0.0, %v829
          %v727 = vphi 0.0, %v830
          %v728 = vphi 0.0, %v835
        $region63: #{tpu_custom_call.1} parent=43 // loop_header_branch
          %722 = sbr.rel (%p719) target = $region67
        $region64: #{tpu_custom_call.1} parent=43 // loop_body
          %vm729 = vcmp.gt.f32.partialorder %v723, %v715
          %vm730 = vcmp.lt.f32.partialorder %v723, %v716
          %vm731 = vmand %vm729, %vm730
          %v732 = vsel %vm731, 1, 0
          %v733 = vcvt.s32.f32 %v732
          %v734 = vmul.f32 %v669, %v723
          %v735 = vstv %s568
          %v736 = vadd.f32 %v735, %v734
          %v737 = vmul.f32 %v670, %v723
          %v738 = vstv %s570
          %v739 = vadd.f32 %v738, %v737
          %v740 = vmul.f32 %v671, %v723
          %v741 = vstv %s572
          %v742 = vadd.f32 %v741, %v740
          %v743 = vstv %s582
          %v744 = vmul.f32 %v743, %v736
          %v745 = vstv %s584
          %v746 = vmul.f32 %v745, %v739
          %v747 = vadd.f32 %v744, %v746
          %v748 = vstv %s586
          %v749 = vmul.f32 %v748, %v742
          %v750 = vadd.f32 %v747, %v749
          %v751 = vstv %s600
          %v752 = vadd.f32 %v750, %v751
          %v753 = vxor.u32 %v752, 2147483648
          %v754 = vmul.f32 %v753, 1.442695
          %v755 = vpow.pop %v754
          %v756 = vadd.f32 %v755, 1.0
          %v757 = vrcp.pop %v756
          %v758 = vmul.f32 1.0, %v757
          %v759 = vstv %s588
          %v760 = vmul.f32 %v759, %v736
          %v761 = vstv %s590
          %v762 = vmul.f32 %v761, %v739
          %v763 = vadd.f32 %v760, %v762
          %v764 = vstv %s592
          %v765 = vmul.f32 %v764, %v742
          %v766 = vadd.f32 %v763, %v765
          %v767 = vstv %s602
          %v768 = vadd.f32 %v766, %v767
          %v769 = vxor.u32 %v768, 2147483648
          %v770 = vmul.f32 %v769, 1.442695
          %v771 = vpow.pop %v770
          %v772 = vadd.f32 %v771, 1.0
          %v773 = vrcp.pop %v772
          %v774 = vmul.f32 1.0, %v773
          %v775 = vstv %s594
          %v776 = vmul.f32 %v775, %v736
          %v777 = vstv %s596
          %v778 = vmul.f32 %v777, %v739
          %v779 = vadd.f32 %v776, %v778
          %v780 = vstv %s598
          %v781 = vmul.f32 %v780, %v742
          %v782 = vadd.f32 %v779, %v781
          %v783 = vstv %s604
          %v784 = vadd.f32 %v782, %v783
          %v785 = vxor.u32 %v784, 2147483648
          %v786 = vmul.f32 %v785, 1.442695
          %v787 = vpow.pop %v786
          %v788 = vadd.f32 %v787, 1.0
          %v789 = vrcp.pop %v788
          %v790 = vmul.f32 1.0, %v789
          %v791 = vstv %s606
          %v792 = vmul.f32 %v791, %v736
          %v793 = vstv %s608
          %v794 = vmul.f32 %v793, %v739
          %v795 = vadd.f32 %v792, %v794
          %v796 = vstv %s610
          %v797 = vmul.f32 %v796, %v742
          %v798 = vadd.f32 %v795, %v797
          %v799 = vstv %s612
          %v800 = vadd.f32 %v798, %v799
          %v801 = vmax.f32 %v800, 0.0
          %vm802 = vcmp.ne.f32.partialorder %v800, %v800
          %v803 = vadd.f32 %v800, 0.0
          %v804 = vand.u32 2147483647, %v800
          %v805 = vsub.f32 0.0, %v804
          %v806 = vmul.f32 %v805, 1.442695
          %v807 = vpow.pop %v806
          %v808 = vadd.f32 %v807, 1.0
          %v809 = vlog2.pop %v808
          %v810 = vmul.f32 %v809, 0.6931472
          %v811 = vmul.f32 -0.5, %v807
          %v812 = vadd.f32 %v811, 1.0
          %v813 = vmul.f32 %v812, %v807
          %v814 = vand.u32 2147483647, %v807
          %vm815 = vcmp.lt.f32.partialorder %v814, 0.0004427343
          %v816 = vsel %vm815, %v813, %v810
          %v817 = vadd.f32 %v801, %v816
          %v818 = vsel %vm802, %v803, %v817
          %v819 = vmul.f32 %v818, 0.1
          %v820 = vadd.f32 %v727, %v819
          %v821 = vmin.f32 %v820, 1.0
          %v822 = vsub.f32 %v821, %v727
          %v823 = vmul.f32 %v822, %v733
          %v824 = vmul.f32 %v758, %v823
          %v825 = vadd.f32 %v724, %v824
          %v826 = vmul.f32 %v774, %v823
          %v827 = vadd.f32 %v725, %v826
          %v828 = vmul.f32 %v790, %v823
          %v829 = vadd.f32 %v726, %v828
          %v830 = vadd.f32 %v727, %v823
          %vm831 = vcmp.eq.f32.partialorder %v823, 0.0
          %v832 = vsel %vm831, 1, 0
          %v833 = vcvt.s32.f32 %v832
          %v834 = vmul.f32 %v833, 0.1
          %v835 = vadd.f32 %v728, %v834
          %v836 = vadd.f32 %v723, 0.1
        $region65: #{tpu_custom_call.1} parent=43 // loop_footer
          %s720 = sadd.s32 %s718, 1
        $region66: #{tpu_custom_call.1} parent=43 // loop_footer_branch
          %717 = sbr.rel target = $region62
        $region67: #{tpu_custom_call.1} parent=43 // loop_exit
          _
        %v837 = vsub.f32 1.0, %v727
        %v838 = vld [vmem:[%s548] sm:$0xf]
        %v839 = vunpack.c.l.bf16 %v838
        %v840 = vmax.f32 %v839, 0.0
        %v841 = vmul.f32 %v837, %v840
        %v842 = vadd.f32 %v724, %v841
        %s843 = scalar_lea.vmem %s548, 4
        %v844 = vld [vmem:[%s843] sm:$0xf]
        %v845 = vunpack.c.l.bf16 %v844
        %v846 = vmax.f32 %v845, 0.0
        %v847 = vmul.f32 %v837, %v846
        %v848 = vadd.f32 %v725, %v847
        %s849 = scalar_lea.vmem %s548, 8
        %v850 = vld [vmem:[%s849] sm:$0xf]
        %v851 = vunpack.c.l.bf16 %v850
        %v852 = vmax.f32 %v851, 0.0
        %v853 = vmul.f32 %v837, %v852
        %v854 = vadd.f32 %v726, %v853
        %855 = vst [vmem:[%s517] sm:$0xff] %v842
        %s856 = scalar_lea.vmem %s517, 8 [#allocation11]
        %857 = vst [vmem:[%s856] sm:$0xff] %v848
        %s858 = scalar_lea.vmem %s517, 16 [#allocation11]
        %859 = vst [vmem:[%s858] sm:$0xff] %v854
        %860 = vst [vmem:[%s524] sm:$0xff] %v727
        %861 = vst [vmem:[%s531] sm:$0xff] %v728
        %v862 = vadd.f32 %v727, 0.1
        %v863 = vlog2.pop %v862
        %v864 = vmul.f32 %v863, 0.6931472
        %v865 = vsub.f32 1.1, %v727
        %v866 = vlog2.pop %v865
        %v867 = vmul.f32 %v866, 0.6931472
        %v868 = vadd.f32 %v864, %v867
        %v869 = vadd.f32 %v868, 2.20727
        %v870 = vmul.f32 %v627, %v869
        %871 = vadd.xlane.f32.xlu0 %v870
        %v872 = vpop.xlane.xlu0 %871
        %v873 = vrot.slane %v872, 4
        %v874 = vadd.f32 %v872, %v873
        %v875 = vrot.slane %v874, 2
        %v876 = vadd.f32 %v874, %v875
        %v877 = vrot.slane %v876, 1
        %v878 = vadd.f32 %v876, %v877
        %s879 = vtos %v878
        %v880 = vld [vmem:[%s474] sm:$0xf]
        %v881 = vunpack.c.l.bf16 %v880
        %v882 = vsub.f32 %v881, %v842
        %v883 = vmul.f32 %v882, 4.0
        %v884 = vstv %s614
        %v885 = vmul.f32 %v884, %v627
        %v886 = vmul.f32 %v885, %v883
        %v887 = vmul.f32 %v886, %v883
        %888 = vst [vmem:[%s538] sm:$0xff] %v887
        %889 = vadd.xlane.f32.xlu0 %v887
        %v890 = vpop.xlane.xlu0 %889
        %v891 = vrot.slane %v890, 4
        %v892 = vadd.f32 %v890, %v891
        %v893 = vrot.slane %v892, 2
        %v894 = vadd.f32 %v892, %v893
        %v895 = vrot.slane %v894, 1
        %v896 = vadd.f32 %v894, %v895
        %s897 = vtos %v896
        %s898 = sadd.f32 %s897, 0.0
        %s899 = scalar_lea.vmem %s474, 4 [#allocation10]
        %v900 = vld [vmem:[%s899] sm:$0xf]
        %v901 = vunpack.c.l.bf16 %v900
        %v902 = vsub.f32 %v901, %v848
        %v903 = vmul.f32 %v902, 4.0
        %v904 = vmul.f32 %v885, %v903
        %v905 = vmul.f32 %v904, %v903
        %s906 = scalar_lea.vmem %s538, 8 [#allocation15]
        %907 = vst [vmem:[%s906] sm:$0xff] %v905
        %908 = vadd.xlane.f32.xlu0 %v905
        %v909 = vpop.xlane.xlu0 %908
        %v910 = vrot.slane %v909, 4
        %v911 = vadd.f32 %v909, %v910
        %v912 = vrot.slane %v911, 2
        %v913 = vadd.f32 %v911, %v912
        %v914 = vrot.slane %v913, 1
        %v915 = vadd.f32 %v913, %v914
        %s916 = vtos %v915
        %s917 = sadd.f32 %s898, %s916
        %s918 = scalar_lea.vmem %s474, 8 [#allocation10]
        %v919 = vld [vmem:[%s918] sm:$0xf]
        %v920 = vunpack.c.l.bf16 %v919
        %v921 = vsub.f32 %v920, %v854
        %v922 = vmul.f32 %v921, 4.0
        %v923 = vmul.f32 %v885, %v922
        %v924 = vmul.f32 %v923, %v922
        %s925 = scalar_lea.vmem %s538, 16 [#allocation15]
        %926 = vst [vmem:[%s925] sm:$0xff] %v924
        %927 = vadd.xlane.f32.xlu0 %v924
        %v928 = vpop.xlane.xlu0 %927
        %v929 = vrot.slane %v928, 4
        %v930 = vadd.f32 %v928, %v929
        %v931 = vrot.slane %v930, 2
        %v932 = vadd.f32 %v930, %v931
        %v933 = vrot.slane %v932, 1
        %v934 = vadd.f32 %v932, %v933
        %s935 = vtos %v934
        %s936 = sadd.f32 %s917, %s935
        %vm937 = vcmp.eq.s32.totalorder %v619, 0
        %v938 = vstv %s879
        %v939 = vsel %vm937, %v938, 0.0
        %vm940 = vcmp.eq.s32.totalorder %v619, 1
        %v941 = vstv %s936
        %v942 = vsel %vm940, %v941, 0.0
        %v943 = vadd.f32 %v939, %v942
        %944 = vst [vmem:[%s544] sm:$0x1] %v943
        %s945 = sand.u32 %s213, 1
        %s946 = scalar_lea.sflag [#allocation5], %s945
        %s947 = sand.u32 %s213, 1
        %s948 = smul.addr %s947, 24
        %s949 = scalar_lea.vmem [#allocation11], %s948
        %s950 = sand.u32 %s39, 1
        %s951 = scalar_lea.sflag [#allocation13], %s950
        %s952 = sand.u32 %s241, 1
        %s953 = smul.addr %s952, 8
        %s954 = scalar_lea.vmem [#allocation12], %s953
        %s955 = sand.u32 %s39, 1
        %s956 = scalar_lea.sflag [#allocation13], %s955
        %s957 = sand.u32 %s269, 1
        %s958 = smul.addr %s957, 8
        %s959 = scalar_lea.vmem [#allocation14], %s958
        %s960 = sand.u32 %s39, 1
        %s961 = scalar_lea.sflag [#allocation16], %s960
        %s962 = sand.u32 %s297, 1
        %s963 = smul.addr %s962, 24
        %s964 = scalar_lea.vmem [#allocation15], %s963
        %s965 = sand.u32 %s39, 1
        %s966 = scalar_lea.sflag [#allocation16], %s965
        %s967 = sand.u32 %s325, 1
        %s968 = scalar_lea.vmem [#allocation17], %s967
        // Predicated region
        $region68: #{tpu_custom_call.1} parent=43 // pred_check
          %p969 = pneg %p223
        $region69: #{tpu_custom_call.1} parent=43 // pred_check_branch
          %971 = sbr.rel (%p969) target = $region71
        $region70: #{tpu_custom_call.1} parent=43 // pred_region
          %s973 = ssub.s32 384, 384
          %974 = vsyncadd %s946, %s973
          %s975 = smul.addr %s43, 3
          %s976 = sadd.s32 %s44, %s975
          %s977 = smul.addr %s976, 128
          %s978 = scalar_lea.hbm %s6, %s977
          %s979 = sshll.u32 %s949, 4
          %s980 = int_to_ptr.vmem [resolvable:$true] %s979
          %985 = dma.vmem_to_hbm [thread:$0]  %s980, 384, %s978, %s946, 128, 128, 8
        $region71: #{tpu_custom_call.1} parent=43 // pred_fallthru
          _
        // Predicated region
        $region72: #{tpu_custom_call.1} parent=43 // pred_check
          %p986 = pneg %p251
        $region73: #{tpu_custom_call.1} parent=43 // pred_check_branch
          %988 = sbr.rel (%p986) target = $region75
        $region74: #{tpu_custom_call.1} parent=43 // pred_region
          %s990 = ssub.s32 128, 128
          %991 = vsyncadd %s951, %s990
          %s992 = sadd.s32 %s44, %s43
          %s993 = smul.addr %s992, 128
          %s994 = scalar_lea.hbm %s7, %s993
          %s996 = sshll.u32 %s954, 4
          %s997 = int_to_ptr.vmem [resolvable:$true] %s996
          %999 = dma.vmem_to_hbm [thread:$0]  %s997, 128, %s994, %s951
        $region75: #{tpu_custom_call.1} parent=43 // pred_fallthru
          _
        // Predicated region
        $region76: #{tpu_custom_call.1} parent=43 // pred_check
          %p1000 = pneg %p279
        $region77: #{tpu_custom_call.1} parent=43 // pred_check_branch
          %1002 = sbr.rel (%p1000) target = $region79
        $region78: #{tpu_custom_call.1} parent=43 // pred_region
          %s1004 = ssub.s32 128, 128
          %1005 = vsyncadd %s956, %s1004
          %s1006 = sadd.s32 %s44, %s43
          %s1007 = smul.addr %s1006, 128
          %s1008 = scalar_lea.hbm %s8, %s1007
          %s1010 = sshll.u32 %s959, 4
          %s1011 = int_to_ptr.vmem [resolvable:$true] %s1010
          %1013 = dma.vmem_to_hbm [thread:$0]  %s1011, 128, %s1008, %s956
        $region79: #{tpu_custom_call.1} parent=43 // pred_fallthru
          _
        // Predicated region
        $region80: #{tpu_custom_call.1} parent=43 // pred_check
          %p1014 = pneg %p307
        $region81: #{tpu_custom_call.1} parent=43 // pred_check_branch
          %1016 = sbr.rel (%p1014) target = $region83
        $region82: #{tpu_custom_call.1} parent=43 // pred_region
          %s1018 = ssub.s32 384, 384
          %1019 = vsyncadd %s961, %s1018
          %s1020 = smul.addr %s43, 3
          %s1021 = sadd.s32 %s44, %s1020
          %s1022 = smul.addr %s1021, 128
          %s1023 = scalar_lea.hbm %s9, %s1022
          %s1024 = sshll.u32 %s964, 4
          %s1025 = int_to_ptr.vmem [resolvable:$true] %s1024
          %1030 = dma.vmem_to_hbm [thread:$0]  %s1025, 384, %s1023, %s961, 128, 128, 8
        $region83: #{tpu_custom_call.1} parent=43 // pred_fallthru
          _
        // Predicated region
        $region84: #{tpu_custom_call.1} parent=43 // pred_check
          %p1031 = pneg %p335
        $region85: #{tpu_custom_call.1} parent=43 // pred_check_branch
          %1033 = sbr.rel (%p1031) target = $region87
        $region86: #{tpu_custom_call.1} parent=43 // pred_region
          %s1035 = ssub.s32 16, 16
          %1036 = vsyncadd %s966, %s1035
          %s1037 = sadd.s32 %s44, %s43
          %s1038 = smul.addr %s1037, 16
          %s1039 = scalar_lea.hbm %s10, %s1038
          %s1041 = sshll.u32 %s968, 4
          %s1042 = int_to_ptr.vmem [resolvable:$true] %s1041
          %1044 = dma.vmem_to_hbm [thread:$0]  %s1042, 16, %s1039, %s966
        $region87: #{tpu_custom_call.1} parent=43 // pred_fallthru
          _
      $region44: #{tpu_custom_call.1} parent=5 // pred_fallthru
        _
      %p1045 = scmp.le.s32.totalorder 2, %s34
      // Predicated region
      $region88: #{tpu_custom_call.1} parent=5 // pred_check
        %p1046 = pneg %p1045
      $region89: #{tpu_custom_call.1} parent=5 // pred_check_branch
        %1048 = sbr.rel (%p1046) target = $region91
      $region90: #{tpu_custom_call.1} parent=5 // pred_region
        %s1049 = ssub.s32 %s34, 2
        // Predicated region
        $region92: #{tpu_custom_call.1} parent=90 // pred_check
          %p1050 = pneg %p229
        $region93: #{tpu_custom_call.1} parent=90 // pred_check_branch
          %1052 = sbr.rel (%p1050) target = $region95
        $region94: #{tpu_custom_call.1} parent=90 // pred_region
          %s1053 = sand.u32 %s214, 1
          %s1054 = scalar_lea.sflag [#allocation5], %s1053
          %s1055 = sand.u32 %s214, 1
          %s1056 = smul.addr %s1055, 24
          %s1057 = scalar_lea.vmem [#allocation11], %s1056
          %1058 = dma.done %s1054, 384
        $region95: #{tpu_custom_call.1} parent=90 // pred_fallthru
          _
        // Predicated region
        $region96: #{tpu_custom_call.1} parent=90 // pred_check
          %p1059 = pneg %p257
        $region97: #{tpu_custom_call.1} parent=90 // pred_check_branch
          %1061 = sbr.rel (%p1059) target = $region99
        $region98: #{tpu_custom_call.1} parent=90 // pred_region
          %s1062 = sand.u32 %s40, 1
          %s1063 = scalar_lea.sflag [#allocation13], %s1062
          %s1064 = sand.u32 %s242, 1
          %s1065 = smul.addr %s1064, 8
          %s1066 = scalar_lea.vmem [#allocation12], %s1065
          %1067 = dma.done %s1063, 128
        $region99: #{tpu_custom_call.1} parent=90 // pred_fallthru
          _
        // Predicated region
        $region100: #{tpu_custom_call.1} parent=90 // pred_check
          %p1068 = pneg %p285
        $region101: #{tpu_custom_call.1} parent=90 // pred_check_branch
          %1070 = sbr.rel (%p1068) target = $region103
        $region102: #{tpu_custom_call.1} parent=90 // pred_region
          %s1071 = sand.u32 %s40, 1
          %s1072 = scalar_lea.sflag [#allocation13], %s1071
          %s1073 = sand.u32 %s270, 1
          %s1074 = smul.addr %s1073, 8
          %s1075 = scalar_lea.vmem [#allocation14], %s1074
          %1076 = dma.done %s1072, 128
        $region103: #{tpu_custom_call.1} parent=90 // pred_fallthru
          _
        // Predicated region
        $region104: #{tpu_custom_call.1} parent=90 // pred_check
          %p1077 = pneg %p313
        $region105: #{tpu_custom_call.1} parent=90 // pred_check_branch
          %1079 = sbr.rel (%p1077) target = $region107
        $region106: #{tpu_custom_call.1} parent=90 // pred_region
          %s1080 = sand.u32 %s40, 1
          %s1081 = scalar_lea.sflag [#allocation16], %s1080
          %s1082 = sand.u32 %s298, 1
          %s1083 = smul.addr %s1082, 24
          %s1084 = scalar_lea.vmem [#allocation15], %s1083
          %1085 = dma.done %s1081, 384
        $region107: #{tpu_custom_call.1} parent=90 // pred_fallthru
          _
        // Predicated region
        $region108: #{tpu_custom_call.1} parent=90 // pred_check
          %p1086 = pneg %p341
        $region109: #{tpu_custom_call.1} parent=90 // pred_check_branch
          %1088 = sbr.rel (%p1086) target = $region111
        $region110: #{tpu_custom_call.1} parent=90 // pred_region
          %s1089 = sand.u32 %s40, 1
          %s1090 = scalar_lea.sflag [#allocation16], %s1089
          %s1091 = sand.u32 %s326, 1
          %s1092 = scalar_lea.vmem [#allocation17], %s1091
          %1093 = dma.done %s1090, 16
        $region111: #{tpu_custom_call.1} parent=90 // pred_fallthru
          _
      $region91: #{tpu_custom_call.1} parent=5 // pred_fallthru
        _
    $region6: #{tpu_custom_call.1} parent=1 // loop_footer
      %s38 = sadd.s32 1, %s34
    $region7: #{tpu_custom_call.1} parent=1 // loop_footer_branch
      %33 = sbr.rel target = $region3
    $region8: #{tpu_custom_call.1} parent=1 // loop_exit
      _
    %1094 = vsyncpa [#allocation4], 1
    %s1095 = scalar_lea.sflag [#allocation4], 1
    %1096 = vsyncpa %s1095, 1
    %1097 = vsyncpa [#allocation9], 1
    %s1098 = scalar_lea.sflag [#allocation9], 1
    %1099 = vsyncpa %s1098, 1
    %1100 = vsyncpa [#allocation5], 1
    %s1101 = scalar_lea.sflag [#allocation5], 1
    %1102 = vsyncpa %s1101, 1
    %1103 = vsyncpa [#allocation13], 1
    %s1104 = scalar_lea.sflag [#allocation13], 1
    %1105 = vsyncpa %s1104, 1
    %1106 = vsyncpa [#allocation16], 1
    %s1107 = scalar_lea.sflag [#allocation16], 1
    %1108 = vsyncpa %s1107, 1
    %1109 = vsyncpa [#allocation6], 1
    %s1110 = scalar_lea.sflag [#allocation6], 1
    %1111 = vsyncpa %s1110, 1

</llo_original>
